<compile_context>
chip_gen: v6e
topology: v6e:2x2x1
jax: 0.10.0
libtpu: 0.0.40
codegen_flags: <defaults>
</compile_context>

<pallas_src>
import functools

import jax
import jax.numpy as jnp
from jax.experimental import pallas as pl
from jax.experimental.pallas import tpu as pltpu


def _round_up(v, m):
    return ((v + m - 1) // m) * m


def _fused_mlp_kernel(*refs, n_layers):
    """Whole MLP forward for one batch tile; everything VMEM-resident.

    refs = (x_ref, w0_ref, b0_ref, ..., w{n-1}_ref, b{n-1}_ref, out_ref)
    Weights arrive already transposed as (K_pad, N_pad); biases as (1, N_pad).
    """
    x_ref = refs[0]
    out_ref = refs[-1]
    param_refs = refs[1:-1]

    h = x_ref[...]
    for i in range(n_layers):
        w = param_refs[2 * i][...]
        b = param_refs[2 * i + 1][...]
        # (tm, K_i) @ (K_i, N_i) on the MXU, f32 accumulation, no transpose.
        h = jnp.dot(h, w, preferred_element_type=jnp.float32) + b
        if i != n_layers - 1:
            h = jnp.maximum(h, 0.0)  # fused ReLU for hidden layers
    out_ref[...] = h.astype(out_ref.dtype)


def mlp_forward(x, params, *, max_tm=256):
    """Fused forward for [Linear -> ReLU]*H -> Linear (one pallas_call).

    params: list of (w, b) with PyTorch layout w: (out, in), b: (out,).
    """
    M, K0 = x.shape
    n_layers = len(params)
    dims = [K0] + [w.shape[0] for (w, _) in params]

    # Lane-dense padding: every feature dim up to a multiple of 128.
    dims_p = [_round_up(d, 128) for d in dims]

    # Batch tile: whole (8-aligned) batch if small, else 256-row tiles.
    tm = min(max_tm, _round_up(M, 8))
    M_pad = _round_up(M, tm)

    # Pad x, and transpose+pad weights/biases ONCE in the wrapper.
    x_p = jnp.zeros((M_pad, dims_p[0]), x.dtype).at[:M, :K0].set(x)
    flat_params = []
    for i, (w, b) in enumerate(params):
        k_in, k_out = dims[i], dims[i + 1]
        kp_in, kp_out = dims_p[i], dims_p[i + 1]
        w_t = jnp.zeros((kp_in, kp_out), w.dtype).at[:k_in, :k_out].set(w.T)
        b_p = jnp.zeros((1, kp_out), b.dtype).at[:, :k_out].set(b.reshape(1, k_out))
        flat_params += [w_t, b_p]

    grid = (M_pad // tm,)

    in_specs = [pl.BlockSpec((tm, dims_p[0]), lambda i: (i, 0))]  # x tile
    for li in range(n_layers):
        kp_in, kp_out = dims_p[li], dims_p[li + 1]
        # Same block for every grid step -> weights fetched once and kept
        # resident across batch tiles.
        in_specs.append(pl.BlockSpec((kp_in, kp_out), lambda i: (0, 0)))
        in_specs.append(pl.BlockSpec((1, kp_out), lambda i: (0, 0)))
    out_spec = pl.BlockSpec((tm, dims_p[-1]), lambda i: (i, 0))

    kernel = functools.partial(_fused_mlp_kernel, n_layers=n_layers)

    out_p = pl.pallas_call(
        kernel,
        out_shape=jax.ShapeDtypeStruct((M_pad, dims_p[-1]), jnp.float32),
        grid_spec=pltpu.PrefetchScalarGridSpec(
            num_scalar_prefetch=0,
            grid=grid,
            in_specs=in_specs,
            out_specs=out_spec,
        ),
        compiler_params=pltpu.CompilerParams(
            dimension_semantics=("parallel",),
        ),
    )(x_p, *flat_params)

    # Strip row/column padding.
    return out_p[:M, : dims[-1]]


def init_mlp_params(key, input_size, hidden_layers, num_classes):
    """Deterministic init matching nn.Linear default bounds U(-1/sqrt(fan_in), +)."""
    dims = [input_size] + list(hidden_layers) + [num_classes]
    params = []
    for i in range(len(dims) - 1):
        fan_in, fan_out = dims[i], dims[i + 1]
        key, wk, bk = jax.random.split(key, 3)
        bound = 1.0 / jnp.sqrt(jnp.float32(fan_in))
        w = jax.random.uniform(
            wk, (fan_out, fan_in), jnp.float32, minval=-bound, maxval=bound
        )
        b = jax.random.uniform(
            bk, (fan_out,), jnp.float32, minval=-bound, maxval=bound
        )
        params.append((w, b))
    return params


def mlp_reference(x, params):
    """Pure-JAX reference for correctness checking."""
    n_layers = len(params)
    out = x
    for i, (w, b) in enumerate(params):
        out = out @ w.T + b
        if i != n_layers - 1:
            out = jnp.maximum(out, 0.0)
    return out


if __name__ == "__main__":
    # Matches the module's defaults: input_size = 32*32*3 = 3072, a couple of
    # hidden layers, num_classes = 10. Small batch for the smoke test.
    input_size = 32 * 32 * 3
    hidden_layers = [64, 32]
    num_classes = 10
    batch = 8

    key = jax.random.PRNGKey(0)
    key, xk = jax.random.split(key)
    x = jax.random.normal(xk, (batch, input_size), dtype=jnp.float32)

    params = init_mlp_params(key, input_size, hidden_layers, num_classes)

    out = mlp_forward(x, params)
    out = jax.block_until_ready(out)

    ref = mlp_reference(x, params)
    assert out.shape == (batch, num_classes), out.shape
    assert jnp.allclose(out, ref, atol=1e-4, rtol=1e-4), "mismatch vs reference"

    print("KERNEL_OK")
</pallas_src>

<mosaic_0001>
module attributes {stable_mosaic.version = 11 : i64} {
  func.func @_fused_mlp_kernel(%arg0: i32, %arg1: memref<8x3072xf32, #tpu.memory_space<vmem>>, %arg2: memref<3072x128xf32, #tpu.memory_space<vmem>>, %arg3: memref<1x128xf32, #tpu.memory_space<vmem>>, %arg4: memref<128x128xf32, #tpu.memory_space<vmem>>, %arg5: memref<1x128xf32, #tpu.memory_space<vmem>>, %arg6: memref<128x128xf32, #tpu.memory_space<vmem>>, %arg7: memref<1x128xf32, #tpu.memory_space<vmem>>, %arg8: memref<8x128xf32, #tpu.memory_space<vmem>>) attributes {dimension_semantics = [#tpu.dimension_semantics<parallel>], iteration_bounds = array<i64: 1>, scalar_prefetch = 0 : i64, scratch_operands = 0 : i64, tpu.core_type = #tpu.core_type<tc>, window_params = [{transform_indices = @transform_0, window_bounds = array<i64: 8, 3072>}, {pipeline_mode = #tpu.pipeline_mode<synchronous>, transform_indices = @transform_1, window_bounds = array<i64: 3072, 128>}, {pipeline_mode = #tpu.pipeline_mode<synchronous>, transform_indices = @transform_2, window_bounds = array<i64: 1, 128>}, {pipeline_mode = #tpu.pipeline_mode<synchronous>, transform_indices = @transform_3, window_bounds = array<i64: 128, 128>}, {pipeline_mode = #tpu.pipeline_mode<synchronous>, transform_indices = @transform_4, window_bounds = array<i64: 1, 128>}, {pipeline_mode = #tpu.pipeline_mode<synchronous>, transform_indices = @transform_5, window_bounds = array<i64: 128, 128>}, {pipeline_mode = #tpu.pipeline_mode<synchronous>, transform_indices = @transform_6, window_bounds = array<i64: 1, 128>}, {transform_indices = @transform_7, window_bounds = array<i64: 8, 128>}]} {
    %c0 = arith.constant 0 : index
    %c0_0 = arith.constant 0 : index
    %0 = vector.load %arg1[%c0, %c0_0] : memref<8x3072xf32, #tpu.memory_space<vmem>>, vector<8x3072xf32>
    %c0_1 = arith.constant 0 : index
    %c0_2 = arith.constant 0 : index
    %1 = vector.load %arg2[%c0_1, %c0_2] : memref<3072x128xf32, #tpu.memory_space<vmem>>, vector<3072x128xf32>
    %c0_3 = arith.constant 0 : index
    %c0_4 = arith.constant 0 : index
    %2 = vector.load %arg3[%c0_3, %c0_4] : memref<1x128xf32, #tpu.memory_space<vmem>>, vector<1x128xf32>
    %cst = arith.constant dense<0.000000e+00> : vector<8x128xf32>
    %3 = tpu.matmul %0, %1, %cst {dimension_numbers = #tpu.dot_dimension_numbers<[1], [0], [0], [1], [0, 0, 1, 1], [], []>} : vector<8x3072xf32>, vector<3072x128xf32>, vector<8x128xf32> -> vector<8x128xf32>
    %4 = vector.broadcast %2 : vector<1x128xf32> to vector<8x128xf32>
    %5 = arith.addf %3, %4 : vector<8x128xf32>
    %cst_5 = arith.constant 0.000000e+00 : f32
    %6 = vector.broadcast %cst_5 : f32 to vector<8x128xf32>
    %7 = arith.maximumf %5, %6 : vector<8x128xf32>
    %c0_6 = arith.constant 0 : index
    %c0_7 = arith.constant 0 : index
    %8 = vector.load %arg4[%c0_6, %c0_7] : memref<128x128xf32, #tpu.memory_space<vmem>>, vector<128x128xf32>
    %c0_8 = arith.constant 0 : index
    %c0_9 = arith.constant 0 : index
    %9 = vector.load %arg5[%c0_8, %c0_9] : memref<1x128xf32, #tpu.memory_space<vmem>>, vector<1x128xf32>
    %cst_10 = arith.constant dense<0.000000e+00> : vector<8x128xf32>
    %10 = tpu.matmul %7, %8, %cst_10 {dimension_numbers = #tpu.dot_dimension_numbers<[1], [0], [0], [1], [0, 0, 1, 1], [], []>} : vector<8x128xf32>, vector<128x128xf32>, vector<8x128xf32> -> vector<8x128xf32>
    %11 = vector.broadcast %9 : vector<1x128xf32> to vector<8x128xf32>
    %12 = arith.addf %10, %11 : vector<8x128xf32>
    %cst_11 = arith.constant 0.000000e+00 : f32
    %13 = vector.broadcast %cst_11 : f32 to vector<8x128xf32>
    %14 = arith.maximumf %12, %13 : vector<8x128xf32>
    %c0_12 = arith.constant 0 : index
    %c0_13 = arith.constant 0 : index
    %15 = vector.load %arg6[%c0_12, %c0_13] : memref<128x128xf32, #tpu.memory_space<vmem>>, vector<128x128xf32>
    %c0_14 = arith.constant 0 : index
    %c0_15 = arith.constant 0 : index
    %16 = vector.load %arg7[%c0_14, %c0_15] : memref<1x128xf32, #tpu.memory_space<vmem>>, vector<1x128xf32>
    %cst_16 = arith.constant dense<0.000000e+00> : vector<8x128xf32>
    %17 = tpu.matmul %14, %15, %cst_16 {dimension_numbers = #tpu.dot_dimension_numbers<[1], [0], [0], [1], [0, 0, 1, 1], [], []>} : vector<8x128xf32>, vector<128x128xf32>, vector<8x128xf32> -> vector<8x128xf32>
    %18 = vector.broadcast %16 : vector<1x128xf32> to vector<8x128xf32>
    %19 = arith.addf %17, %18 : vector<8x128xf32>
    %c0_17 = arith.constant 0 : index
    %c0_18 = arith.constant 0 : index
    %20 = vector.load %arg8[%c0_17, %c0_18] : memref<8x128xf32, #tpu.memory_space<vmem>>, vector<8x128xf32>
    tpu.vector_store %arg8[%c0_17, %c0_18], %19 {strides = array<i32>} : memref<8x128xf32, #tpu.memory_space<vmem>>, vector<8x128xf32>,
    return
  }
  func.func @transform_0(%arg0: i32) -> (i32, i32) {
    %c0_i32 = arith.constant 0 : i32
    %c0_i32_0 = arith.constant 0 : i32
    return %arg0, %c0_i32 : i32, i32
  }
  func.func @transform_1(%arg0: i32) -> (i32, i32) {
    %c0_i32 = arith.constant 0 : i32
    %c0_i32_0 = arith.constant 0 : i32
    %c0_i32_1 = arith.constant 0 : i32
    return %c0_i32, %c0_i32_0 : i32, i32
  }
  func.func @transform_2(%arg0: i32) -> (i32, i32) {
    %c0_i32 = arith.constant 0 : i32
    %c0_i32_0 = arith.constant 0 : i32
    %c0_i32_1 = arith.constant 0 : i32
    return %c0_i32, %c0_i32_0 : i32, i32
  }
  func.func @transform_3(%arg0: i32) -> (i32, i32) {
    %c0_i32 = arith.constant 0 : i32
    %c0_i32_0 = arith.constant 0 : i32
    %c0_i32_1 = arith.constant 0 : i32
    return %c0_i32, %c0_i32_0 : i32, i32
  }
  func.func @transform_4(%arg0: i32) -> (i32, i32) {
    %c0_i32 = arith.constant 0 : i32
    %c0_i32_0 = arith.constant 0 : i32
    %c0_i32_1 = arith.constant 0 : i32
    return %c0_i32, %c0_i32_0 : i32, i32
  }
  func.func @transform_5(%arg0: i32) -> (i32, i32) {
    %c0_i32 = arith.constant 0 : i32
    %c0_i32_0 = arith.constant 0 : i32
    %c0_i32_1 = arith.constant 0 : i32
    return %c0_i32, %c0_i32_0 : i32, i32
  }
  func.func @transform_6(%arg0: i32) -> (i32, i32) {
    %c0_i32 = arith.constant 0 : i32
    %c0_i32_0 = arith.constant 0 : i32
    %c0_i32_1 = arith.constant 0 : i32
    return %c0_i32, %c0_i32_0 : i32, i32
  }
  func.func @transform_7(%arg0: i32) -> (i32, i32) {
    %c0_i32 = arith.constant 0 : i32
    %c0_i32_0 = arith.constant 0 : i32
    return %arg0, %c0_i32 : i32, i32
  }
}

</mosaic_0001>

<llo_original>
// kernel: tpu_custom_call.1
$region0: #{tpu_custom_call.1}
  #allocation0 [shape = 'u32[]', space=smem, size = 0x4, offset = 0x4, fixed_abs, tag = 'smem constant byte address 0x4 - core index']
  #allocation1 [shape = 'u32[144,128]{1,0:T(1,128)}', space=vmem, size = 0x12000, scoped, tag = 'internal scratch']
  %s0 = inlined_call_operand.hbm [shape: f32[8,3072], index: 0, kind: input, shape index: {}]
  %s1 = inlined_call_operand.hbm [shape: f32[3072,128], index: 1, kind: input, shape index: {}]
  %s2 = inlined_call_operand.hbm [shape: f32[1,128], index: 2, kind: input, shape index: {}]
  %s3 = inlined_call_operand.hbm [shape: f32[128,128], index: 3, kind: input, shape index: {}]
  %s4 = inlined_call_operand.hbm [shape: f32[1,128], index: 4, kind: input, shape index: {}]
  %s5 = inlined_call_operand.hbm [shape: f32[128,128], index: 5, kind: input, shape index: {}]
  %s6 = inlined_call_operand.hbm [shape: f32[1,128], index: 6, kind: input, shape index: {}]
  %s7 = inlined_call_operand.hbm [shape: f32[8,128], index: 7, kind: output, shape index: {}]
  %s8 = sld [smem:[#allocation0]]
  $region66: #{tpu_custom_call.1} parent=0
    _
  %s10 = ssub.s32 1, %s8
  %s11 = scalar_select 0, %s10, %s8
  $region1: #{tpu_custom_call.1} parent=0
    #allocation2 [shape = 'u8[98304]{0}', space=vmem, size = 0x18000, scoped, tag = 'input window, operand 0, single buffered']
    #allocation3 [shape = 's32[1]{0}', space=sflag, size = 0x4, scoped, tag = 'scoped memory for tpu_custom_call.1']
    #allocation4 [shape = 's32[1]{0}', space=sflag, size = 0x4, scoped, tag = 'scoped memory for tpu_custom_call.1']
    #allocation5 [shape = 'u8[1572864]{0}', space=vmem, size = 0x180000, scoped, tag = 'input window, operand 1, single buffered']
    #allocation6 [shape = 's32[1]{0}', space=sflag, size = 0x4, scoped, tag = 'scoped memory for tpu_custom_call.1']
    #allocation7 [shape = 'u8[512]{0}', space=vmem, size = 0x400, scoped, tag = 'input window, operand 2, single buffered']
    #allocation8 [shape = 'u8[65536]{0}', space=vmem, size = 0x10000, scoped, tag = 'input window, operand 3, single buffered']
    #allocation9 [shape = 's32[1]{0}', space=sflag, size = 0x4, scoped, tag = 'scoped memory for tpu_custom_call.1']
    #allocation10 [shape = 'u8[512]{0}', space=vmem, size = 0x400, scoped, tag = 'input window, operand 4, single buffered']
    #allocation11 [shape = 'u8[65536]{0}', space=vmem, size = 0x10000, scoped, tag = 'input window, operand 5, single buffered']
    #allocation12 [shape = 's32[1]{0}', space=sflag, size = 0x4, scoped, tag = 'scoped memory for tpu_custom_call.1']
    #allocation13 [shape = 'u8[512]{0}', space=vmem, size = 0x400, scoped, tag = 'input window, operand 6, single buffered']
    #allocation14 [shape = 'u8[4096]{0}', space=vmem, size = 0x1000, scoped, tag = 'output window, operand 0, single buffered']
    %12 = vsyncpa [#allocation3], 0
    %13 = vsyncpa [#allocation6], 0
    %14 = vsyncpa [#allocation9], 0
    %15 = vsyncpa [#allocation12], 0
    %16 = vsyncpa [#allocation4], 0
    // Predicated region
    $region2: #{tpu_custom_call.1} parent=1 // pred_check
      _
    $region3: #{tpu_custom_call.1} parent=1 // pred_check_branch
      %18 = sbr.rel (0) target = $region5
    $region4: #{tpu_custom_call.1} parent=1 // pred_region
      %s20 = ssub.s32 3072, 3072
      %21 = vsyncadd [#allocation3], %s20
      %s23 = sshll.u32 [#allocation2], 4
      %s24 = int_to_ptr.vmem [resolvable:$true] %s23
      %26 = dma.hbm_to_vmem [thread:$0]  %s0, 3072, %s24, [#allocation3]
    $region5: #{tpu_custom_call.1} parent=1 // pred_fallthru
      _
    // Predicated region
    $region6: #{tpu_custom_call.1} parent=1 // pred_check
      _
    $region7: #{tpu_custom_call.1} parent=1 // pred_check_branch
      %28 = sbr.rel (0) target = $region9
    $region8: #{tpu_custom_call.1} parent=1 // pred_region
      %s30 = ssub.s32 49152, 49152
      %31 = vsyncadd [#allocation6], %s30
      %s32 = sshll.u32 [#allocation5], 4
      %s33 = int_to_ptr.vmem [resolvable:$true] %s32
      %38 = dma.hbm_to_vmem [thread:$0]  %s1, 49152, %s33, [#allocation6], 128, 128, 8
    $region9: #{tpu_custom_call.1} parent=1 // pred_fallthru
      _
    // Predicated region
    $region10: #{tpu_custom_call.1} parent=1 // pred_check
      _
    $region11: #{tpu_custom_call.1} parent=1 // pred_check_branch
      %40 = sbr.rel (0) target = $region13
    $region12: #{tpu_custom_call.1} parent=1 // pred_region
      %s42 = ssub.s32 16, 16
      %43 = vsyncadd [#allocation6], %s42
      %s45 = sshll.u32 [#allocation7], 4
      %s46 = int_to_ptr.vmem [resolvable:$true] %s45
      %48 = dma.hbm_to_vmem [thread:$0]  %s2, 16, %s46, [#allocation6]
    $region13: #{tpu_custom_call.1} parent=1 // pred_fallthru
      _
    // Predicated region
    $region14: #{tpu_custom_call.1} parent=1 // pred_check
      _
    $region15: #{tpu_custom_call.1} parent=1 // pred_check_branch
      %50 = sbr.rel (0) target = $region17
    $region16: #{tpu_custom_call.1} parent=1 // pred_region
      %s52 = ssub.s32 2048, 2048
      %53 = vsyncadd [#allocation9], %s52
      %s54 = sshll.u32 [#allocation8], 4
      %s55 = int_to_ptr.vmem [resolvable:$true] %s54
      %60 = dma.hbm_to_vmem [thread:$0]  %s3, 2048, %s55, [#allocation9], 128, 128, 8
    $region17: #{tpu_custom_call.1} parent=1 // pred_fallthru
      _
    // Predicated region
    $region18: #{tpu_custom_call.1} parent=1 // pred_check
      _
    $region19: #{tpu_custom_call.1} parent=1 // pred_check_branch
      %62 = sbr.rel (0) target = $region21
    $region20: #{tpu_custom_call.1} parent=1 // pred_region
      %s64 = ssub.s32 16, 16
      %65 = vsyncadd [#allocation9], %s64
      %s67 = sshll.u32 [#allocation10], 4
      %s68 = int_to_ptr.vmem [resolvable:$true] %s67
      %70 = dma.hbm_to_vmem [thread:$0]  %s4, 16, %s68, [#allocation9]
    $region21: #{tpu_custom_call.1} parent=1 // pred_fallthru
      _
    // Predicated region
    $region22: #{tpu_custom_call.1} parent=1 // pred_check
      _
    $region23: #{tpu_custom_call.1} parent=1 // pred_check_branch
      %72 = sbr.rel (0) target = $region25
    $region24: #{tpu_custom_call.1} parent=1 // pred_region
      %s74 = ssub.s32 2048, 2048
      %75 = vsyncadd [#allocation12], %s74
      %s76 = sshll.u32 [#allocation11], 4
      %s77 = int_to_ptr.vmem [resolvable:$true] %s76
      %82 = dma.hbm_to_vmem [thread:$0]  %s5, 2048, %s77, [#allocation12], 128, 128, 8
    $region25: #{tpu_custom_call.1} parent=1 // pred_fallthru
      _
    // Predicated region
    $region26: #{tpu_custom_call.1} parent=1 // pred_check
      _
    $region27: #{tpu_custom_call.1} parent=1 // pred_check_branch
      %84 = sbr.rel (0) target = $region29
    $region28: #{tpu_custom_call.1} parent=1 // pred_region
      %s86 = ssub.s32 16, 16
      %87 = vsyncadd [#allocation12], %s86
      %s89 = sshll.u32 [#allocation13], 4
      %s90 = int_to_ptr.vmem [resolvable:$true] %s89
      %92 = dma.hbm_to_vmem [thread:$0]  %s6, 16, %s90, [#allocation12]
    $region29: #{tpu_custom_call.1} parent=1 // pred_fallthru
      _
    // Predicated region
    $region30: #{tpu_custom_call.1} parent=1 // pred_check
      _
    $region31: #{tpu_custom_call.1} parent=1 // pred_check_branch
      %94 = sbr.rel (0) target = $region33
    $region32: #{tpu_custom_call.1} parent=1 // pred_region
      %95 = dma.done [#allocation3], 3072
    $region33: #{tpu_custom_call.1} parent=1 // pred_fallthru
      _
    // Predicated region
    $region34: #{tpu_custom_call.1} parent=1 // pred_check
      _
    $region35: #{tpu_custom_call.1} parent=1 // pred_check_branch
      %97 = sbr.rel (0) target = $region37
    $region36: #{tpu_custom_call.1} parent=1 // pred_region
      %98 = dma.done [#allocation6], 49152
    $region37: #{tpu_custom_call.1} parent=1 // pred_fallthru
      _
    // Predicated region
    $region38: #{tpu_custom_call.1} parent=1 // pred_check
      _
    $region39: #{tpu_custom_call.1} parent=1 // pred_check_branch
      %100 = sbr.rel (0) target = $region41
    $region40: #{tpu_custom_call.1} parent=1 // pred_region
      %101 = dma.done [#allocation6], 16
    $region41: #{tpu_custom_call.1} parent=1 // pred_fallthru
      _
    // Predicated region
    $region42: #{tpu_custom_call.1} parent=1 // pred_check
      _
    $region43: #{tpu_custom_call.1} parent=1 // pred_check_branch
      %103 = sbr.rel (0) target = $region45
    $region44: #{tpu_custom_call.1} parent=1 // pred_region
      %104 = dma.done [#allocation9], 2048
    $region45: #{tpu_custom_call.1} parent=1 // pred_fallthru
      _
    // Predicated region
    $region46: #{tpu_custom_call.1} parent=1 // pred_check
      _
    $region47: #{tpu_custom_call.1} parent=1 // pred_check_branch
      %106 = sbr.rel (0) target = $region49
    $region48: #{tpu_custom_call.1} parent=1 // pred_region
      %107 = dma.done [#allocation9], 16
    $region49: #{tpu_custom_call.1} parent=1 // pred_fallthru
      _
    // Predicated region
    $region50: #{tpu_custom_call.1} parent=1 // pred_check
      _
    $region51: #{tpu_custom_call.1} parent=1 // pred_check_branch
      %109 = sbr.rel (0) target = $region53
    $region52: #{tpu_custom_call.1} parent=1 // pred_region
      %110 = dma.done [#allocation12], 2048
    $region53: #{tpu_custom_call.1} parent=1 // pred_fallthru
      _
    // Predicated region
    $region54: #{tpu_custom_call.1} parent=1 // pred_check
      _
    $region55: #{tpu_custom_call.1} parent=1 // pred_check_branch
      %112 = sbr.rel (0) target = $region57
    $region56: #{tpu_custom_call.1} parent=1 // pred_region
      %113 = dma.done [#allocation12], 16
    $region57: #{tpu_custom_call.1} parent=1 // pred_fallthru
      _
    %v114 = vld [vmem:[#allocation2] sm:$0xff]
    %v115 = vld [vmem:[#allocation2 + $0x8] sm:$0xff]
    %v116 = vld [vmem:[#allocation2 + $0x10] sm:$0xff]
    %v117 = vld [vmem:[#allocation2 + $0x18] sm:$0xff]
    %v118 = vld [vmem:[#allocation2 + $0x20] sm:$0xff]
    %v119 = vld [vmem:[#allocation2 + $0x28] sm:$0xff]
    %v120 = vld [vmem:[#allocation2 + $0x30] sm:$0xff]
    %v121 = vld [vmem:[#allocation2 + $0x38] sm:$0xff]
    %v122 = vld [vmem:[#allocation2 + $0x40] sm:$0xff]
    %v123 = vld [vmem:[#allocation2 + $0x48] sm:$0xff]
    %v124 = vld [vmem:[#allocation2 + $0x50] sm:$0xff]
    %v125 = vld [vmem:[#allocation2 + $0x58] sm:$0xff]
    %v126 = vld [vmem:[#allocation2 + $0x60] sm:$0xff]
    %v127 = vld [vmem:[#allocation2 + $0x68] sm:$0xff]
    %v128 = vld [vmem:[#allocation2 + $0x70] sm:$0xff]
    %v129 = vld [vmem:[#allocation2 + $0x78] sm:$0xff]
    %v130 = vld [vmem:[#allocation2 + $0x80] sm:$0xff]
    %v131 = vld [vmem:[#allocation2 + $0x88] sm:$0xff]
    %v132 = vld [vmem:[#allocation2 + $0x90] sm:$0xff]
    %v133 = vld [vmem:[#allocation2 + $0x98] sm:$0xff]
    %v134 = vld [vmem:[#allocation2 + $0xa0] sm:$0xff]
    %v135 = vld [vmem:[#allocation2 + $0xa8] sm:$0xff]
    %v136 = vld [vmem:[#allocation2 + $0xb0] sm:$0xff]
    %v137 = vld [vmem:[#allocation2 + $0xb8] sm:$0xff]
    %v138 = vld [vmem:[#allocation5] sm:$0xff]
    %v139 = vld [vmem:[#allocation5 + $0x8] sm:$0xff]
    %v140 = vld [vmem:[#allocation5 + $0x10] sm:$0xff]
    %v141 = vld [vmem:[#allocation5 + $0x18] sm:$0xff]
    %v142 = vld [vmem:[#allocation5 + $0x20] sm:$0xff]
    %v143 = vld [vmem:[#allocation5 + $0x28] sm:$0xff]
    %v144 = vld [vmem:[#allocation5 + $0x30] sm:$0xff]
    %v145 = vld [vmem:[#allocation5 + $0x38] sm:$0xff]
    %v146 = vld [vmem:[#allocation5 + $0x40] sm:$0xff]
    %v147 = vld [vmem:[#allocation5 + $0x48] sm:$0xff]
    %v148 = vld [vmem:[#allocation5 + $0x50] sm:$0xff]
    %v149 = vld [vmem:[#allocation5 + $0x58] sm:$0xff]
    %v150 = vld [vmem:[#allocation5 + $0x60] sm:$0xff]
    %v151 = vld [vmem:[#allocation5 + $0x68] sm:$0xff]
    %v152 = vld [vmem:[#allocation5 + $0x70] sm:$0xff]
    %v153 = vld [vmem:[#allocation5 + $0x78] sm:$0xff]
    %v154 = vld [vmem:[#allocation5 + $0x80] sm:$0xff]
    %v155 = vld [vmem:[#allocation5 + $0x88] sm:$0xff]
    %v156 = vld [vmem:[#allocation5 + $0x90] sm:$0xff]
    %v157 = vld [vmem:[#allocation5 + $0x98] sm:$0xff]
    %v158 = vld [vmem:[#allocation5 + $0xa0] sm:$0xff]
    %v159 = vld [vmem:[#allocation5 + $0xa8] sm:$0xff]
    %v160 = vld [vmem:[#allocation5 + $0xb0] sm:$0xff]
    %v161 = vld [vmem:[#allocation5 + $0xb8] sm:$0xff]
    %v162 = vld [vmem:[#allocation5 + $0xc0] sm:$0xff]
    %v163 = vld [vmem:[#allocation5 + $0xc8] sm:$0xff]
    %v164 = vld [vmem:[#allocation5 + $0xd0] sm:$0xff]
    %v165 = vld [vmem:[#allocation5 + $0xd8] sm:$0xff]
    %v166 = vld [vmem:[#allocation5 + $0xe0] sm:$0xff]
    %v167 = vld [vmem:[#allocation5 + $0xe8] sm:$0xff]
    %v168 = vld [vmem:[#allocation5 + $0xf0] sm:$0xff]
    %v169 = vld [vmem:[#allocation5 + $0xf8] sm:$0xff]
    %v170 = vld [vmem:[#allocation5 + $0x100] sm:$0xff]
    %v171 = vld [vmem:[#allocation5 + $0x108] sm:$0xff]
    %v172 = vld [vmem:[#allocation5 + $0x110] sm:$0xff]
    %v173 = vld [vmem:[#allocation5 + $0x118] sm:$0xff]
    %v174 = vld [vmem:[#allocation5 + $0x120] sm:$0xff]
    %v175 = vld [vmem:[#allocation5 + $0x128] sm:$0xff]
    %v176 = vld [vmem:[#allocation5 + $0x130] sm:$0xff]
    %v177 = vld [vmem:[#allocation5 + $0x138] sm:$0xff]
    %v178 = vld [vmem:[#allocation5 + $0x140] sm:$0xff]
    %v179 = vld [vmem:[#allocation5 + $0x148] sm:$0xff]
    %v180 = vld [vmem:[#allocation5 + $0x150] sm:$0xff]
    %v181 = vld [vmem:[#allocation5 + $0x158] sm:$0xff]
    %v182 = vld [vmem:[#allocation5 + $0x160] sm:$0xff]
    %v183 = vld [vmem:[#allocation5 + $0x168] sm:$0xff]
    %v184 = vld [vmem:[#allocation5 + $0x170] sm:$0xff]
    %v185 = vld [vmem:[#allocation5 + $0x178] sm:$0xff]
    %v186 = vld [vmem:[#allocation5 + $0x180] sm:$0xff]
    %v187 = vld [vmem:[#allocation5 + $0x188] sm:$0xff]
    %v188 = vld [vmem:[#allocation5 + $0x190] sm:$0xff]
    %v189 = vld [vmem:[#allocation5 + $0x198] sm:$0xff]
    %v190 = vld [vmem:[#allocation5 + $0x1a0] sm:$0xff]
    %v191 = vld [vmem:[#allocation5 + $0x1a8] sm:$0xff]
    %v192 = vld [vmem:[#allocation5 + $0x1b0] sm:$0xff]
    %v193 = vld [vmem:[#allocation5 + $0x1b8] sm:$0xff]
    %v194 = vld [vmem:[#allocation5 + $0x1c0] sm:$0xff]
    %v195 = vld [vmem:[#allocation5 + $0x1c8] sm:$0xff]
    %v196 = vld [vmem:[#allocation5 + $0x1d0] sm:$0xff]
    %v197 = vld [vmem:[#allocation5 + $0x1d8] sm:$0xff]
    %v198 = vld [vmem:[#allocation5 + $0x1e0] sm:$0xff]
    %v199 = vld [vmem:[#allocation5 + $0x1e8] sm:$0xff]
    %v200 = vld [vmem:[#allocation5 + $0x1f0] sm:$0xff]
    %v201 = vld [vmem:[#allocation5 + $0x1f8] sm:$0xff]
    %v202 = vld [vmem:[#allocation5 + $0x200] sm:$0xff]
    %v203 = vld [vmem:[#allocation5 + $0x208] sm:$0xff]
    %v204 = vld [vmem:[#allocation5 + $0x210] sm:$0xff]
    %v205 = vld [vmem:[#allocation5 + $0x218] sm:$0xff]
    %v206 = vld [vmem:[#allocation5 + $0x220] sm:$0xff]
    %v207 = vld [vmem:[#allocation5 + $0x228] sm:$0xff]
    %v208 = vld [vmem:[#allocation5 + $0x230] sm:$0xff]
    %v209 = vld [vmem:[#allocation5 + $0x238] sm:$0xff]
    %v210 = vld [vmem:[#allocation5 + $0x240] sm:$0xff]
    %v211 = vld [vmem:[#allocation5 + $0x248] sm:$0xff]
    %v212 = vld [vmem:[#allocation5 + $0x250] sm:$0xff]
    %v213 = vld [vmem:[#allocation5 + $0x258] sm:$0xff]
    %v214 = vld [vmem:[#allocation5 + $0x260] sm:$0xff]
    %v215 = vld [vmem:[#allocation5 + $0x268] sm:$0xff]
    %v216 = vld [vmem:[#allocation5 + $0x270] sm:$0xff]
    %v217 = vld [vmem:[#allocation5 + $0x278] sm:$0xff]
    %v218 = vld [vmem:[#allocation5 + $0x280] sm:$0xff]
    %v219 = vld [vmem:[#allocation5 + $0x288] sm:$0xff]
    %v220 = vld [vmem:[#allocation5 + $0x290] sm:$0xff]
    %v221 = vld [vmem:[#allocation5 + $0x298] sm:$0xff]
    %v222 = vld [vmem:[#allocation5 + $0x2a0] sm:$0xff]
    %v223 = vld [vmem:[#allocation5 + $0x2a8] sm:$0xff]
    %v224 = vld [vmem:[#allocation5 + $0x2b0] sm:$0xff]
    %v225 = vld [vmem:[#allocation5 + $0x2b8] sm:$0xff]
    %v226 = vld [vmem:[#allocation5 + $0x2c0] sm:$0xff]
    %v227 = vld [vmem:[#allocation5 + $0x2c8] sm:$0xff]
    %v228 = vld [vmem:[#allocation5 + $0x2d0] sm:$0xff]
    %v229 = vld [vmem:[#allocation5 + $0x2d8] sm:$0xff]
    %v230 = vld [vmem:[#allocation5 + $0x2e0] sm:$0xff]
    %v231 = vld [vmem:[#allocation5 + $0x2e8] sm:$0xff]
    %v232 = vld [vmem:[#allocation5 + $0x2f0] sm:$0xff]
    %v233 = vld [vmem:[#allocation5 + $0x2f8] sm:$0xff]
    %v234 = vld [vmem:[#allocation5 + $0x300] sm:$0xff]
    %v235 = vld [vmem:[#allocation5 + $0x308] sm:$0xff]
    %v236 = vld [vmem:[#allocation5 + $0x310] sm:$0xff]
    %v237 = vld [vmem:[#allocation5 + $0x318] sm:$0xff]
    %v238 = vld [vmem:[#allocation5 + $0x320] sm:$0xff]
    %v239 = vld [vmem:[#allocation5 + $0x328] sm:$0xff]
    %v240 = vld [vmem:[#allocation5 + $0x330] sm:$0xff]
    %v241 = vld [vmem:[#allocation5 + $0x338] sm:$0xff]
    %v242 = vld [vmem:[#allocation5 + $0x340] sm:$0xff]
    %v243 = vld [vmem:[#allocation5 + $0x348] sm:$0xff]
    %v244 = vld [vmem:[#allocation5 + $0x350] sm:$0xff]
    %v245 = vld [vmem:[#allocation5 + $0x358] sm:$0xff]
    %v246 = vld [vmem:[#allocation5 + $0x360] sm:$0xff]
    %v247 = vld [vmem:[#allocation5 + $0x368] sm:$0xff]
    %v248 = vld [vmem:[#allocation5 + $0x370] sm:$0xff]
    %v249 = vld [vmem:[#allocation5 + $0x378] sm:$0xff]
    %v250 = vld [vmem:[#allocation5 + $0x380] sm:$0xff]
    %v251 = vld [vmem:[#allocation5 + $0x388] sm:$0xff]
    %v252 = vld [vmem:[#allocation5 + $0x390] sm:$0xff]
    %v253 = vld [vmem:[#allocation5 + $0x398] sm:$0xff]
    %v254 = vld [vmem:[#allocation5 + $0x3a0] sm:$0xff]
    %v255 = vld [vmem:[#allocation5 + $0x3a8] sm:$0xff]
    %v256 = vld [vmem:[#allocation5 + $0x3b0] sm:$0xff]
    %v257 = vld [vmem:[#allocation5 + $0x3b8] sm:$0xff]
    %v258 = vld [vmem:[#allocation5 + $0x3c0] sm:$0xff]
    %v259 = vld [vmem:[#allocation5 + $0x3c8] sm:$0xff]
    %v260 = vld [vmem:[#allocation5 + $0x3d0] sm:$0xff]
    %v261 = vld [vmem:[#allocation5 + $0x3d8] sm:$0xff]
    %v262 = vld [vmem:[#allocation5 + $0x3e0] sm:$0xff]
    %v263 = vld [vmem:[#allocation5 + $0x3e8] sm:$0xff]
    %v264 = vld [vmem:[#allocation5 + $0x3f0] sm:$0xff]
    %v265 = vld [vmem:[#allocation5 + $0x3f8] sm:$0xff]
    %v266 = vld [vmem:[#allocation5 + $0x400] sm:$0xff]
    %v267 = vld [vmem:[#allocation5 + $0x408] sm:$0xff]
    %v268 = vld [vmem:[#allocation5 + $0x410] sm:$0xff]
    %v269 = vld [vmem:[#allocation5 + $0x418] sm:$0xff]
    %v270 = vld [vmem:[#allocation5 + $0x420] sm:$0xff]
    %v271 = vld [vmem:[#allocation5 + $0x428] sm:$0xff]
    %v272 = vld [vmem:[#allocation5 + $0x430] sm:$0xff]
    %v273 = vld [vmem:[#allocation5 + $0x438] sm:$0xff]
    %v274 = vld [vmem:[#allocation5 + $0x440] sm:$0xff]
    %v275 = vld [vmem:[#allocation5 + $0x448] sm:$0xff]
    %v276 = vld [vmem:[#allocation5 + $0x450] sm:$0xff]
    %v277 = vld [vmem:[#allocation5 + $0x458] sm:$0xff]
    %v278 = vld [vmem:[#allocation5 + $0x460] sm:$0xff]
    %v279 = vld [vmem:[#allocation5 + $0x468] sm:$0xff]
    %v280 = vld [vmem:[#allocation5 + $0x470] sm:$0xff]
    %v281 = vld [vmem:[#allocation5 + $0x478] sm:$0xff]
    %v282 = vld [vmem:[#allocation5 + $0x480] sm:$0xff]
    %v283 = vld [vmem:[#allocation5 + $0x488] sm:$0xff]
    %v284 = vld [vmem:[#allocation5 + $0x490] sm:$0xff]
    %v285 = vld [vmem:[#allocation5 + $0x498] sm:$0xff]
    %v286 = vld [vmem:[#allocation5 + $0x4a0] sm:$0xff]
    %v287 = vld [vmem:[#allocation5 + $0x4a8] sm:$0xff]
    %v288 = vld [vmem:[#allocation5 + $0x4b0] sm:$0xff]
    %v289 = vld [vmem:[#allocation5 + $0x4b8] sm:$0xff]
    %v290 = vld [vmem:[#allocation5 + $0x4c0] sm:$0xff]
    %v291 = vld [vmem:[#allocation5 + $0x4c8] sm:$0xff]
    %v292 = vld [vmem:[#allocation5 + $0x4d0] sm:$0xff]
    %v293 = vld [vmem:[#allocation5 + $0x4d8] sm:$0xff]
    %v294 = vld [vmem:[#allocation5 + $0x4e0] sm:$0xff]
    %v295 = vld [vmem:[#allocation5 + $0x4e8] sm:$0xff]
    %v296 = vld [vmem:[#allocation5 + $0x4f0] sm:$0xff]
    %v297 = vld [vmem:[#allocation5 + $0x4f8] sm:$0xff]
    %v298 = vld [vmem:[#allocation5 + $0x500] sm:$0xff]
    %v299 = vld [vmem:[#allocation5 + $0x508] sm:$0xff]
    %v300 = vld [vmem:[#allocation5 + $0x510] sm:$0xff]
    %v301 = vld [vmem:[#allocation5 + $0x518] sm:$0xff]
    %v302 = vld [vmem:[#allocation5 + $0x520] sm:$0xff]
    %v303 = vld [vmem:[#allocation5 + $0x528] sm:$0xff]
    %v304 = vld [vmem:[#allocation5 + $0x530] sm:$0xff]
    %v305 = vld [vmem:[#allocation5 + $0x538] sm:$0xff]
    %v306 = vld [vmem:[#allocation5 + $0x540] sm:$0xff]
    %v307 = vld [vmem:[#allocation5 + $0x548] sm:$0xff]
    %v308 = vld [vmem:[#allocation5 + $0x550] sm:$0xff]
    %v309 = vld [vmem:[#allocation5 + $0x558] sm:$0xff]
    %v310 = vld [vmem:[#allocation5 + $0x560] sm:$0xff]
    %v311 = vld [vmem:[#allocation5 + $0x568] sm:$0xff]
    %v312 = vld [vmem:[#allocation5 + $0x570] sm:$0xff]
    %v313 = vld [vmem:[#allocation5 + $0x578] sm:$0xff]
    %v314 = vld [vmem:[#allocation5 + $0x580] sm:$0xff]
    %v315 = vld [vmem:[#allocation5 + $0x588] sm:$0xff]
    %v316 = vld [vmem:[#allocation5 + $0x590] sm:$0xff]
    %v317 = vld [vmem:[#allocation5 + $0x598] sm:$0xff]
    %v318 = vld [vmem:[#allocation5 + $0x5a0] sm:$0xff]
    %v319 = vld [vmem:[#allocation5 + $0x5a8] sm:$0xff]
    %v320 = vld [vmem:[#allocation5 + $0x5b0] sm:$0xff]
    %v321 = vld [vmem:[#allocation5 + $0x5b8] sm:$0xff]
    %v322 = vld [vmem:[#allocation5 + $0x5c0] sm:$0xff]
    %v323 = vld [vmem:[#allocation5 + $0x5c8] sm:$0xff]
    %v324 = vld [vmem:[#allocation5 + $0x5d0] sm:$0xff]
    %v325 = vld [vmem:[#allocation5 + $0x5d8] sm:$0xff]
    %v326 = vld [vmem:[#allocation5 + $0x5e0] sm:$0xff]
    %v327 = vld [vmem:[#allocation5 + $0x5e8] sm:$0xff]
    %v328 = vld [vmem:[#allocation5 + $0x5f0] sm:$0xff]
    %v329 = vld [vmem:[#allocation5 + $0x5f8] sm:$0xff]
    %v330 = vld [vmem:[#allocation5 + $0x600] sm:$0xff]
    %v331 = vld [vmem:[#allocation5 + $0x608] sm:$0xff]
    %v332 = vld [vmem:[#allocation5 + $0x610] sm:$0xff]
    %v333 = vld [vmem:[#allocation5 + $0x618] sm:$0xff]
    %v334 = vld [vmem:[#allocation5 + $0x620] sm:$0xff]
    %v335 = vld [vmem:[#allocation5 + $0x628] sm:$0xff]
    %v336 = vld [vmem:[#allocation5 + $0x630] sm:$0xff]
    %v337 = vld [vmem:[#allocation5 + $0x638] sm:$0xff]
    %v338 = vld [vmem:[#allocation5 + $0x640] sm:$0xff]
    %v339 = vld [vmem:[#allocation5 + $0x648] sm:$0xff]
    %v340 = vld [vmem:[#allocation5 + $0x650] sm:$0xff]
    %v341 = vld [vmem:[#allocation5 + $0x658] sm:$0xff]
    %v342 = vld [vmem:[#allocation5 + $0x660] sm:$0xff]
    %v343 = vld [vmem:[#allocation5 + $0x668] sm:$0xff]
    %v344 = vld [vmem:[#allocation5 + $0x670] sm:$0xff]
    %v345 = vld [vmem:[#allocation5 + $0x678] sm:$0xff]
    %v346 = vld [vmem:[#allocation5 + $0x680] sm:$0xff]
    %v347 = vld [vmem:[#allocation5 + $0x688] sm:$0xff]
    %v348 = vld [vmem:[#allocation5 + $0x690] sm:$0xff]
    %v349 = vld [vmem:[#allocation5 + $0x698] sm:$0xff]
    %v350 = vld [vmem:[#allocation5 + $0x6a0] sm:$0xff]
    %v351 = vld [vmem:[#allocation5 + $0x6a8] sm:$0xff]
    %v352 = vld [vmem:[#allocation5 + $0x6b0] sm:$0xff]
    %v353 = vld [vmem:[#allocation5 + $0x6b8] sm:$0xff]
    %v354 = vld [vmem:[#allocation5 + $0x6c0] sm:$0xff]
    %v355 = vld [vmem:[#allocation5 + $0x6c8] sm:$0xff]
    %v356 = vld [vmem:[#allocation5 + $0x6d0] sm:$0xff]
    %v357 = vld [vmem:[#allocation5 + $0x6d8] sm:$0xff]
    %v358 = vld [vmem:[#allocation5 + $0x6e0] sm:$0xff]
    %v359 = vld [vmem:[#allocation5 + $0x6e8] sm:$0xff]
    %v360 = vld [vmem:[#allocation5 + $0x6f0] sm:$0xff]
    %v361 = vld [vmem:[#allocation5 + $0x6f8] sm:$0xff]
    %v362 = vld [vmem:[#allocation5 + $0x700] sm:$0xff]
    %v363 = vld [vmem:[#allocation5 + $0x708] sm:$0xff]
    %v364 = vld [vmem:[#allocation5 + $0x710] sm:$0xff]
    %v365 = vld [vmem:[#allocation5 + $0x718] sm:$0xff]
    %v366 = vld [vmem:[#allocation5 + $0x720] sm:$0xff]
    %v367 = vld [vmem:[#allocation5 + $0x728] sm:$0xff]
    %v368 = vld [vmem:[#allocation5 + $0x730] sm:$0xff]
    %v369 = vld [vmem:[#allocation5 + $0x738] sm:$0xff]
    %v370 = vld [vmem:[#allocation5 + $0x740] sm:$0xff]
    %v371 = vld [vmem:[#allocation5 + $0x748] sm:$0xff]
    %v372 = vld [vmem:[#allocation5 + $0x750] sm:$0xff]
    %v373 = vld [vmem:[#allocation5 + $0x758] sm:$0xff]
    %v374 = vld [vmem:[#allocation5 + $0x760] sm:$0xff]
    %v375 = vld [vmem:[#allocation5 + $0x768] sm:$0xff]
    %v376 = vld [vmem:[#allocation5 + $0x770] sm:$0xff]
    %v377 = vld [vmem:[#allocation5 + $0x778] sm:$0xff]
    %v378 = vld [vmem:[#allocation5 + $0x780] sm:$0xff]
    %v379 = vld [vmem:[#allocation5 + $0x788] sm:$0xff]
    %v380 = vld [vmem:[#allocation5 + $0x790] sm:$0xff]
    %v381 = vld [vmem:[#allocation5 + $0x798] sm:$0xff]
    %v382 = vld [vmem:[#allocation5 + $0x7a0] sm:$0xff]
    %v383 = vld [vmem:[#allocation5 + $0x7a8] sm:$0xff]
    %v384 = vld [vmem:[#allocation5 + $0x7b0] sm:$0xff]
    %v385 = vld [vmem:[#allocation5 + $0x7b8] sm:$0xff]
    %v386 = vld [vmem:[#allocation5 + $0x7c0] sm:$0xff]
    %v387 = vld [vmem:[#allocation5 + $0x7c8] sm:$0xff]
    %v388 = vld [vmem:[#allocation5 + $0x7d0] sm:$0xff]
    %v389 = vld [vmem:[#allocation5 + $0x7d8] sm:$0xff]
    %v390 = vld [vmem:[#allocation5 + $0x7e0] sm:$0xff]
    %v391 = vld [vmem:[#allocation5 + $0x7e8] sm:$0xff]
    %v392 = vld [vmem:[#allocation5 + $0x7f0] sm:$0xff]
    %v393 = vld [vmem:[#allocation5 + $0x7f8] sm:$0xff]
    %v394 = vld [vmem:[#allocation5 + $0x800] sm:$0xff]
    %v395 = vld [vmem:[#allocation5 + $0x808] sm:$0xff]
    %v396 = vld [vmem:[#allocation5 + $0x810] sm:$0xff]
    %v397 = vld [vmem:[#allocation5 + $0x818] sm:$0xff]
    %v398 = vld [vmem:[#allocation5 + $0x820] sm:$0xff]
    %v399 = vld [vmem:[#allocation5 + $0x828] sm:$0xff]
    %v400 = vld [vmem:[#allocation5 + $0x830] sm:$0xff]
    %v401 = vld [vmem:[#allocation5 + $0x838] sm:$0xff]
    %v402 = vld [vmem:[#allocation5 + $0x840] sm:$0xff]
    %v403 = vld [vmem:[#allocation5 + $0x848] sm:$0xff]
    %v404 = vld [vmem:[#allocation5 + $0x850] sm:$0xff]
    %v405 = vld [vmem:[#allocation5 + $0x858] sm:$0xff]
    %v406 = vld [vmem:[#allocation5 + $0x860] sm:$0xff]
    %v407 = vld [vmem:[#allocation5 + $0x868] sm:$0xff]
    %v408 = vld [vmem:[#allocation5 + $0x870] sm:$0xff]
    %v409 = vld [vmem:[#allocation5 + $0x878] sm:$0xff]
    %v410 = vld [vmem:[#allocation5 + $0x880] sm:$0xff]
    %v411 = vld [vmem:[#allocation5 + $0x888] sm:$0xff]
    %v412 = vld [vmem:[#allocation5 + $0x890] sm:$0xff]
    %v413 = vld [vmem:[#allocation5 + $0x898] sm:$0xff]
    %v414 = vld [vmem:[#allocation5 + $0x8a0] sm:$0xff]
    %v415 = vld [vmem:[#allocation5 + $0x8a8] sm:$0xff]
    %v416 = vld [vmem:[#allocation5 + $0x8b0] sm:$0xff]
    %v417 = vld [vmem:[#allocation5 + $0x8b8] sm:$0xff]
    %v418 = vld [vmem:[#allocation5 + $0x8c0] sm:$0xff]
    %v419 = vld [vmem:[#allocation5 + $0x8c8] sm:$0xff]
    %v420 = vld [vmem:[#allocation5 + $0x8d0] sm:$0xff]
    %v421 = vld [vmem:[#allocation5 + $0x8d8] sm:$0xff]
    %v422 = vld [vmem:[#allocation5 + $0x8e0] sm:$0xff]
    %v423 = vld [vmem:[#allocation5 + $0x8e8] sm:$0xff]
    %v424 = vld [vmem:[#allocation5 + $0x8f0] sm:$0xff]
    %v425 = vld [vmem:[#allocation5 + $0x8f8] sm:$0xff]
    %v426 = vld [vmem:[#allocation5 + $0x900] sm:$0xff]
    %v427 = vld [vmem:[#allocation5 + $0x908] sm:$0xff]
    %v428 = vld [vmem:[#allocation5 + $0x910] sm:$0xff]
    %v429 = vld [vmem:[#allocation5 + $0x918] sm:$0xff]
    %v430 = vld [vmem:[#allocation5 + $0x920] sm:$0xff]
    %v431 = vld [vmem:[#allocation5 + $0x928] sm:$0xff]
    %v432 = vld [vmem:[#allocation5 + $0x930] sm:$0xff]
    %v433 = vld [vmem:[#allocation5 + $0x938] sm:$0xff]
    %v434 = vld [vmem:[#allocation5 + $0x940] sm:$0xff]
    %v435 = vld [vmem:[#allocation5 + $0x948] sm:$0xff]
    %v436 = vld [vmem:[#allocation5 + $0x950] sm:$0xff]
    %v437 = vld [vmem:[#allocation5 + $0x958] sm:$0xff]
    %v438 = vld [vmem:[#allocation5 + $0x960] sm:$0xff]
    %v439 = vld [vmem:[#allocation5 + $0x968] sm:$0xff]
    %v440 = vld [vmem:[#allocation5 + $0x970] sm:$0xff]
    %v441 = vld [vmem:[#allocation5 + $0x978] sm:$0xff]
    %v442 = vld [vmem:[#allocation5 + $0x980] sm:$0xff]
    %v443 = vld [vmem:[#allocation5 + $0x988] sm:$0xff]
    %v444 = vld [vmem:[#allocation5 + $0x990] sm:$0xff]
    %v445 = vld [vmem:[#allocation5 + $0x998] sm:$0xff]
    %v446 = vld [vmem:[#allocation5 + $0x9a0] sm:$0xff]
    %v447 = vld [vmem:[#allocation5 + $0x9a8] sm:$0xff]
    %v448 = vld [vmem:[#allocation5 + $0x9b0] sm:$0xff]
    %v449 = vld [vmem:[#allocation5 + $0x9b8] sm:$0xff]
    %v450 = vld [vmem:[#allocation5 + $0x9c0] sm:$0xff]
    %v451 = vld [vmem:[#allocation5 + $0x9c8] sm:$0xff]
    %v452 = vld [vmem:[#allocation5 + $0x9d0] sm:$0xff]
    %v453 = vld [vmem:[#allocation5 + $0x9d8] sm:$0xff]
    %v454 = vld [vmem:[#allocation5 + $0x9e0] sm:$0xff]
    %v455 = vld [vmem:[#allocation5 + $0x9e8] sm:$0xff]
    %v456 = vld [vmem:[#allocation5 + $0x9f0] sm:$0xff]
    %v457 = vld [vmem:[#allocation5 + $0x9f8] sm:$0xff]
    %v458 = vld [vmem:[#allocation5 + $0xa00] sm:$0xff]
    %v459 = vld [vmem:[#allocation5 + $0xa08] sm:$0xff]
    %v460 = vld [vmem:[#allocation5 + $0xa10] sm:$0xff]
    %v461 = vld [vmem:[#allocation5 + $0xa18] sm:$0xff]
    %v462 = vld [vmem:[#allocation5 + $0xa20] sm:$0xff]
    %v463 = vld [vmem:[#allocation5 + $0xa28] sm:$0xff]
    %v464 = vld [vmem:[#allocation5 + $0xa30] sm:$0xff]
    %v465 = vld [vmem:[#allocation5 + $0xa38] sm:$0xff]
    %v466 = vld [vmem:[#allocation5 + $0xa40] sm:$0xff]
    %v467 = vld [vmem:[#allocation5 + $0xa48] sm:$0xff]
    %v468 = vld [vmem:[#allocation5 + $0xa50] sm:$0xff]
    %v469 = vld [vmem:[#allocation5 + $0xa58] sm:$0xff]
    %v470 = vld [vmem:[#allocation5 + $0xa60] sm:$0xff]
    %v471 = vld [vmem:[#allocation5 + $0xa68] sm:$0xff]
    %v472 = vld [vmem:[#allocation5 + $0xa70] sm:$0xff]
    %v473 = vld [vmem:[#allocation5 + $0xa78] sm:$0xff]
    %v474 = vld [vmem:[#allocation5 + $0xa80] sm:$0xff]
    %v475 = vld [vmem:[#allocation5 + $0xa88] sm:$0xff]
    %v476 = vld [vmem:[#allocation5 + $0xa90] sm:$0xff]
    %v477 = vld [vmem:[#allocation5 + $0xa98] sm:$0xff]
    %v478 = vld [vmem:[#allocation5 + $0xaa0] sm:$0xff]
    %v479 = vld [vmem:[#allocation5 + $0xaa8] sm:$0xff]
    %v480 = vld [vmem:[#allocation5 + $0xab0] sm:$0xff]
    %v481 = vld [vmem:[#allocation5 + $0xab8] sm:$0xff]
    %v482 = vld [vmem:[#allocation5 + $0xac0] sm:$0xff]
    %v483 = vld [vmem:[#allocation5 + $0xac8] sm:$0xff]
    %v484 = vld [vmem:[#allocation5 + $0xad0] sm:$0xff]
    %v485 = vld [vmem:[#allocation5 + $0xad8] sm:$0xff]
    %v486 = vld [vmem:[#allocation5 + $0xae0] sm:$0xff]
    %v487 = vld [vmem:[#allocation5 + $0xae8] sm:$0xff]
    %v488 = vld [vmem:[#allocation5 + $0xaf0] sm:$0xff]
    %v489 = vld [vmem:[#allocation5 + $0xaf8] sm:$0xff]
    %v490 = vld [vmem:[#allocation5 + $0xb00] sm:$0xff]
    %v491 = vld [vmem:[#allocation5 + $0xb08] sm:$0xff]
    %v492 = vld [vmem:[#allocation5 + $0xb10] sm:$0xff]
    %v493 = vld [vmem:[#allocation5 + $0xb18] sm:$0xff]
    %v494 = vld [vmem:[#allocation5 + $0xb20] sm:$0xff]
    %v495 = vld [vmem:[#allocation5 + $0xb28] sm:$0xff]
    %v496 = vld [vmem:[#allocation5 + $0xb30] sm:$0xff]
    %v497 = vld [vmem:[#allocation5 + $0xb38] sm:$0xff]
    %v498 = vld [vmem:[#allocation5 + $0xb40] sm:$0xff]
    %v499 = vld [vmem:[#allocation5 + $0xb48] sm:$0xff]
    %v500 = vld [vmem:[#allocation5 + $0xb50] sm:$0xff]
    %v501 = vld [vmem:[#allocation5 + $0xb58] sm:$0xff]
    %v502 = vld [vmem:[#allocation5 + $0xb60] sm:$0xff]
    %v503 = vld [vmem:[#allocation5 + $0xb68] sm:$0xff]
    %v504 = vld [vmem:[#allocation5 + $0xb70] sm:$0xff]
    %v505 = vld [vmem:[#allocation5 + $0xb78] sm:$0xff]
    %v506 = vld [vmem:[#allocation5 + $0xb80] sm:$0xff]
    %v507 = vld [vmem:[#allocation5 + $0xb88] sm:$0xff]
    %v508 = vld [vmem:[#allocation5 + $0xb90] sm:$0xff]
    %v509 = vld [vmem:[#allocation5 + $0xb98] sm:$0xff]
    %v510 = vld [vmem:[#allocation5 + $0xba0] sm:$0xff]
    %v511 = vld [vmem:[#allocation5 + $0xba8] sm:$0xff]
    %v512 = vld [vmem:[#allocation5 + $0xbb0] sm:$0xff]
    %v513 = vld [vmem:[#allocation5 + $0xbb8] sm:$0xff]
    %v514 = vld [vmem:[#allocation5 + $0xbc0] sm:$0xff]
    %v515 = vld [vmem:[#allocation5 + $0xbc8] sm:$0xff]
    %v516 = vld [vmem:[#allocation5 + $0xbd0] sm:$0xff]
    %v517 = vld [vmem:[#allocation5 + $0xbd8] sm:$0xff]
    %v518 = vld [vmem:[#allocation5 + $0xbe0] sm:$0xff]
    %v519 = vld [vmem:[#allocation5 + $0xbe8] sm:$0xff]
    %v520 = vld [vmem:[#allocation5 + $0xbf0] sm:$0xff]
    %v521 = vld [vmem:[#allocation5 + $0xbf8] sm:$0xff]
    %v522 = vld [vmem:[#allocation7] sm:$0x1]
    %v524 = vlaneseq
    %v525 = vshrl.u32 %v524, 7
    %v526 = vsub.s32 0, %v525
    %v527 = vrot.slane %v522, %v526
    %529 = vmatprep.subr.mxu0 0.0
    %530 = vmatpush1.msra.mxu0 %v153
    %531 = vmatprep.subr.mxu0 0.0
    %532 = vmatpush1.msra.mxu0 %v152
    %533 = vmatprep.subr.mxu0 0.0
    %534 = vmatpush1.msra.mxu0 %v151
    %535 = vmatprep.subr.mxu0 0.0
    %536 = vmatpush1.msra.mxu0 %v150
    %537 = vmatprep.subr.mxu0 0.0
    %538 = vmatpush1.msra.mxu0 %v149
    %539 = vmatprep.subr.mxu0 0.0
    %540 = vmatpush1.msra.mxu0 %v148
    %541 = vmatprep.subr.mxu0 0.0
    %542 = vmatpush1.msra.mxu0 %v147
    %543 = vmatprep.subr.mxu0 0.0
    %544 = vmatpush1.msra.mxu0 %v146
    %545 = vmatprep.subr.mxu0 0.0
    %546 = vmatpush1.msra.mxu0 %v145
    %547 = vmatprep.subr.mxu0 0.0
    %548 = vmatpush1.msra.mxu0 %v144
    %549 = vmatprep.subr.mxu0 0.0
    %550 = vmatpush1.msra.mxu0 %v143
    %551 = vmatprep.subr.mxu0 0.0
    %552 = vmatpush1.msra.mxu0 %v142
    %553 = vmatprep.subr.mxu0 0.0
    %554 = vmatpush1.msra.mxu0 %v141
    %555 = vmatprep.subr.mxu0 0.0
    %556 = vmatpush1.msra.mxu0 %v140
    %557 = vmatprep.subr.mxu0 0.0
    %558 = vmatpush1.msra.mxu0 %v139
    %559 = vmatprep.subr.mxu0 0.0
    %560 = vmatpush1.msra.mxu0 %v138
    %561 = vmatprep.subr.mxu0 0.0
    %562 = vmatpush2.msra.mxu0 %v169
    %563 = vmatprep.subr.mxu0 0.0
    %564 = vmatpush2.msra.mxu0 %v168
    %565 = vmatprep.subr.mxu0 0.0
    %566 = vmatpush2.msra.mxu0 %v167
    %567 = vmatprep.subr.mxu0 0.0
    %568 = vmatpush2.msra.mxu0 %v166
    %569 = vmatprep.subr.mxu0 0.0
    %570 = vmatpush2.msra.mxu0 %v165
    %571 = vmatprep.subr.mxu0 0.0
    %572 = vmatpush2.msra.mxu0 %v164
    %573 = vmatprep.subr.mxu0 0.0
    %574 = vmatpush2.msra.mxu0 %v163
    %575 = vmatprep.subr.mxu0 0.0
    %576 = vmatpush2.msra.mxu0 %v162
    %577 = vmatprep.subr.mxu0 0.0
    %578 = vmatpush2.msra.mxu0 %v161
    %579 = vmatprep.subr.mxu0 0.0
    %580 = vmatpush2.msra.mxu0 %v160
    %581 = vmatprep.subr.mxu0 0.0
    %582 = vmatpush2.msra.mxu0 %v159
    %583 = vmatprep.subr.mxu0 0.0
    %584 = vmatpush2.msra.mxu0 %v158
    %585 = vmatprep.subr.mxu0 0.0
    %586 = vmatpush2.msra.mxu0 %v157
    %587 = vmatprep.subr.mxu0 0.0
    %588 = vmatpush2.msra.mxu0 %v156
    %589 = vmatprep.subr.mxu0 0.0
    %590 = vmatpush2.msra.mxu0 %v155
    %591 = vmatprep.subr.mxu0 0.0
    %592 = vmatpush2.msra.mxu0 %v154
    %593 = vmatprep.mubr.f32.mxu0 %v115
    %594 = vmatmul.mubr.f32.gmra.mxu0 %v114
    %v595 = vpop.f32.mrf.mxu0
    %v596 = vadd.f32 %v527, %v595
    %v597 = vpop.f32.mrf.mxu0
    %598 = vdwg.mxu0
    %599 = vmatprep.subr.mxu0 0.0
    %600 = vmatpush1.msra.mxu0 %v185
    %601 = vmatprep.subr.mxu0 0.0
    %602 = vmatpush1.msra.mxu0 %v184
    %603 = vmatprep.subr.mxu0 0.0
    %604 = vmatpush1.msra.mxu0 %v183
    %605 = vmatprep.subr.mxu0 0.0
    %606 = vmatpush1.msra.mxu0 %v182
    %607 = vmatprep.subr.mxu0 0.0
    %608 = vmatpush1.msra.mxu0 %v181
    %609 = vmatprep.subr.mxu0 0.0
    %610 = vmatpush1.msra.mxu0 %v180
    %611 = vmatprep.subr.mxu0 0.0
    %612 = vmatpush1.msra.mxu0 %v179
    %613 = vmatprep.subr.mxu0 0.0
    %614 = vmatpush1.msra.mxu0 %v178
    %615 = vmatprep.subr.mxu0 0.0
    %616 = vmatpush1.msra.mxu0 %v177
    %617 = vmatprep.subr.mxu0 0.0
    %618 = vmatpush1.msra.mxu0 %v176
    %619 = vmatprep.subr.mxu0 0.0
    %620 = vmatpush1.msra.mxu0 %v175
    %621 = vmatprep.subr.mxu0 0.0
    %622 = vmatpush1.msra.mxu0 %v174
    %623 = vmatprep.subr.mxu0 0.0
    %624 = vmatpush1.msra.mxu0 %v173
    %625 = vmatprep.subr.mxu0 0.0
    %626 = vmatpush1.msra.mxu0 %v172
    %627 = vmatprep.subr.mxu0 0.0
    %628 = vmatpush1.msra.mxu0 %v171
    %629 = vmatprep.subr.mxu0 0.0
    %630 = vmatpush1.msra.mxu0 %v170
    %631 = vmatprep.subr.mxu0 0.0
    %632 = vmatpush2.msra.mxu0 %v201
    %633 = vmatprep.subr.mxu0 0.0
    %634 = vmatpush2.msra.mxu0 %v200
    %635 = vmatprep.subr.mxu0 0.0
    %636 = vmatpush2.msra.mxu0 %v199
    %637 = vmatprep.subr.mxu0 0.0
    %638 = vmatpush2.msra.mxu0 %v198
    %639 = vmatprep.subr.mxu0 0.0
    %640 = vmatpush2.msra.mxu0 %v197
    %641 = vmatprep.subr.mxu0 0.0
    %642 = vmatpush2.msra.mxu0 %v196
    %643 = vmatprep.subr.mxu0 0.0
    %644 = vmatpush2.msra.mxu0 %v195
    %645 = vmatprep.subr.mxu0 0.0
    %646 = vmatpush2.msra.mxu0 %v194
    %647 = vmatprep.subr.mxu0 0.0
    %648 = vmatpush2.msra.mxu0 %v193
    %649 = vmatprep.subr.mxu0 0.0
    %650 = vmatpush2.msra.mxu0 %v192
    %651 = vmatprep.subr.mxu0 0.0
    %652 = vmatpush2.msra.mxu0 %v191
    %653 = vmatprep.subr.mxu0 0.0
    %654 = vmatpush2.msra.mxu0 %v190
    %655 = vmatprep.subr.mxu0 0.0
    %656 = vmatpush2.msra.mxu0 %v189
    %657 = vmatprep.subr.mxu0 0.0
    %658 = vmatpush2.msra.mxu0 %v188
    %659 = vmatprep.subr.mxu0 0.0
    %660 = vmatpush2.msra.mxu0 %v187
    %661 = vmatprep.subr.mxu0 0.0
    %662 = vmatpush2.msra.mxu0 %v186
    %663 = vmatprep.mubr.f32.mxu0 %v117
    %664 = vmatmul.mubr.f32.gmra.mxu0 %v116
    %v665 = vpop.f32.mrf.mxu0
    %v666 = vadd.f32 %v596, %v665
    %v667 = vpop.f32.mrf.mxu0
    %668 = vdwg.mxu0
    %669 = vmatprep.subr.mxu0 0.0
    %670 = vmatpush1.msra.mxu0 %v217
    %671 = vmatprep.subr.mxu0 0.0
    %672 = vmatpush1.msra.mxu0 %v216
    %673 = vmatprep.subr.mxu0 0.0
    %674 = vmatpush1.msra.mxu0 %v215
    %675 = vmatprep.subr.mxu0 0.0
    %676 = vmatpush1.msra.mxu0 %v214
    %677 = vmatprep.subr.mxu0 0.0
    %678 = vmatpush1.msra.mxu0 %v213
    %679 = vmatprep.subr.mxu0 0.0
    %680 = vmatpush1.msra.mxu0 %v212
    %681 = vmatprep.subr.mxu0 0.0
    %682 = vmatpush1.msra.mxu0 %v211
    %683 = vmatprep.subr.mxu0 0.0
    %684 = vmatpush1.msra.mxu0 %v210
    %685 = vmatprep.subr.mxu0 0.0
    %686 = vmatpush1.msra.mxu0 %v209
    %687 = vmatprep.subr.mxu0 0.0
    %688 = vmatpush1.msra.mxu0 %v208
    %689 = vmatprep.subr.mxu0 0.0
    %690 = vmatpush1.msra.mxu0 %v207
    %691 = vmatprep.subr.mxu0 0.0
    %692 = vmatpush1.msra.mxu0 %v206
    %693 = vmatprep.subr.mxu0 0.0
    %694 = vmatpush1.msra.mxu0 %v205
    %695 = vmatprep.subr.mxu0 0.0
    %696 = vmatpush1.msra.mxu0 %v204
    %697 = vmatprep.subr.mxu0 0.0
    %698 = vmatpush1.msra.mxu0 %v203
    %699 = vmatprep.subr.mxu0 0.0
    %700 = vmatpush1.msra.mxu0 %v202
    %701 = vmatprep.subr.mxu0 0.0
    %702 = vmatpush2.msra.mxu0 %v233
    %703 = vmatprep.subr.mxu0 0.0
    %704 = vmatpush2.msra.mxu0 %v232
    %705 = vmatprep.subr.mxu0 0.0
    %706 = vmatpush2.msra.mxu0 %v231
    %707 = vmatprep.subr.mxu0 0.0
    %708 = vmatpush2.msra.mxu0 %v230
    %709 = vmatprep.subr.mxu0 0.0
    %710 = vmatpush2.msra.mxu0 %v229
    %711 = vmatprep.subr.mxu0 0.0
    %712 = vmatpush2.msra.mxu0 %v228
    %713 = vmatprep.subr.mxu0 0.0
    %714 = vmatpush2.msra.mxu0 %v227
    %715 = vmatprep.subr.mxu0 0.0
    %716 = vmatpush2.msra.mxu0 %v226
    %717 = vmatprep.subr.mxu0 0.0
    %718 = vmatpush2.msra.mxu0 %v225
    %719 = vmatprep.subr.mxu0 0.0
    %720 = vmatpush2.msra.mxu0 %v224
    %721 = vmatprep.subr.mxu0 0.0
    %722 = vmatpush2.msra.mxu0 %v223
    %723 = vmatprep.subr.mxu0 0.0
    %724 = vmatpush2.msra.mxu0 %v222
    %725 = vmatprep.subr.mxu0 0.0
    %726 = vmatpush2.msra.mxu0 %v221
    %727 = vmatprep.subr.mxu0 0.0
    %728 = vmatpush2.msra.mxu0 %v220
    %729 = vmatprep.subr.mxu0 0.0
    %730 = vmatpush2.msra.mxu0 %v219
    %731 = vmatprep.subr.mxu0 0.0
    %732 = vmatpush2.msra.mxu0 %v218
    %733 = vmatprep.mubr.f32.mxu0 %v119
    %734 = vmatmul.mubr.f32.gmra.mxu0 %v118
    %v735 = vpop.f32.mrf.mxu0
    %v736 = vadd.f32 %v666, %v735
    %v737 = vpop.f32.mrf.mxu0
    %738 = vdwg.mxu0
    %739 = vmatprep.subr.mxu0 0.0
    %740 = vmatpush1.msra.mxu0 %v249
    %741 = vmatprep.subr.mxu0 0.0
    %742 = vmatpush1.msra.mxu0 %v248
    %743 = vmatprep.subr.mxu0 0.0
    %744 = vmatpush1.msra.mxu0 %v247
    %745 = vmatprep.subr.mxu0 0.0
    %746 = vmatpush1.msra.mxu0 %v246
    %747 = vmatprep.subr.mxu0 0.0
    %748 = vmatpush1.msra.mxu0 %v245
    %749 = vmatprep.subr.mxu0 0.0
    %750 = vmatpush1.msra.mxu0 %v244
    %751 = vmatprep.subr.mxu0 0.0
    %752 = vmatpush1.msra.mxu0 %v243
    %753 = vmatprep.subr.mxu0 0.0
    %754 = vmatpush1.msra.mxu0 %v242
    %755 = vmatprep.subr.mxu0 0.0
    %756 = vmatpush1.msra.mxu0 %v241
    %757 = vmatprep.subr.mxu0 0.0
    %758 = vmatpush1.msra.mxu0 %v240
    %759 = vmatprep.subr.mxu0 0.0
    %760 = vmatpush1.msra.mxu0 %v239
    %761 = vmatprep.subr.mxu0 0.0
    %762 = vmatpush1.msra.mxu0 %v238
    %763 = vmatprep.subr.mxu0 0.0
    %764 = vmatpush1.msra.mxu0 %v237
    %765 = vmatprep.subr.mxu0 0.0
    %766 = vmatpush1.msra.mxu0 %v236
    %767 = vmatprep.subr.mxu0 0.0
    %768 = vmatpush1.msra.mxu0 %v235
    %769 = vmatprep.subr.mxu0 0.0
    %770 = vmatpush1.msra.mxu0 %v234
    %771 = vmatprep.subr.mxu0 0.0
    %772 = vmatpush2.msra.mxu0 %v265
    %773 = vmatprep.subr.mxu0 0.0
    %774 = vmatpush2.msra.mxu0 %v264
    %775 = vmatprep.subr.mxu0 0.0
    %776 = vmatpush2.msra.mxu0 %v263
    %777 = vmatprep.subr.mxu0 0.0
    %778 = vmatpush2.msra.mxu0 %v262
    %779 = vmatprep.subr.mxu0 0.0
    %780 = vmatpush2.msra.mxu0 %v261
    %781 = vmatprep.subr.mxu0 0.0
    %782 = vmatpush2.msra.mxu0 %v260
    %783 = vmatprep.subr.mxu0 0.0
    %784 = vmatpush2.msra.mxu0 %v259
    %785 = vmatprep.subr.mxu0 0.0
    %786 = vmatpush2.msra.mxu0 %v258
    %787 = vmatprep.subr.mxu0 0.0
    %788 = vmatpush2.msra.mxu0 %v257
    %789 = vmatprep.subr.mxu0 0.0
    %790 = vmatpush2.msra.mxu0 %v256
    %791 = vmatprep.subr.mxu0 0.0
    %792 = vmatpush2.msra.mxu0 %v255
    %793 = vmatprep.subr.mxu0 0.0
    %794 = vmatpush2.msra.mxu0 %v254
    %795 = vmatprep.subr.mxu0 0.0
    %796 = vmatpush2.msra.mxu0 %v253
    %797 = vmatprep.subr.mxu0 0.0
    %798 = vmatpush2.msra.mxu0 %v252
    %799 = vmatprep.subr.mxu0 0.0
    %800 = vmatpush2.msra.mxu0 %v251
    %801 = vmatprep.subr.mxu0 0.0
    %802 = vmatpush2.msra.mxu0 %v250
    %803 = vmatprep.mubr.f32.mxu0 %v121
    %804 = vmatmul.mubr.f32.gmra.mxu0 %v120
    %v805 = vpop.f32.mrf.mxu0
    %v806 = vadd.f32 %v736, %v805
    %v807 = vpop.f32.mrf.mxu0
    %808 = vdwg.mxu0
    %809 = vmatprep.subr.mxu0 0.0
    %810 = vmatpush1.msra.mxu0 %v281
    %811 = vmatprep.subr.mxu0 0.0
    %812 = vmatpush1.msra.mxu0 %v280
    %813 = vmatprep.subr.mxu0 0.0
    %814 = vmatpush1.msra.mxu0 %v279
    %815 = vmatprep.subr.mxu0 0.0
    %816 = vmatpush1.msra.mxu0 %v278
    %817 = vmatprep.subr.mxu0 0.0
    %818 = vmatpush1.msra.mxu0 %v277
    %819 = vmatprep.subr.mxu0 0.0
    %820 = vmatpush1.msra.mxu0 %v276
    %821 = vmatprep.subr.mxu0 0.0
    %822 = vmatpush1.msra.mxu0 %v275
    %823 = vmatprep.subr.mxu0 0.0
    %824 = vmatpush1.msra.mxu0 %v274
    %825 = vmatprep.subr.mxu0 0.0
    %826 = vmatpush1.msra.mxu0 %v273
    %827 = vmatprep.subr.mxu0 0.0
    %828 = vmatpush1.msra.mxu0 %v272
    %829 = vmatprep.subr.mxu0 0.0
    %830 = vmatpush1.msra.mxu0 %v271
    %831 = vmatprep.subr.mxu0 0.0
    %832 = vmatpush1.msra.mxu0 %v270
    %833 = vmatprep.subr.mxu0 0.0
    %834 = vmatpush1.msra.mxu0 %v269
    %835 = vmatprep.subr.mxu0 0.0
    %836 = vmatpush1.msra.mxu0 %v268
    %837 = vmatprep.subr.mxu0 0.0
    %838 = vmatpush1.msra.mxu0 %v267
    %839 = vmatprep.subr.mxu0 0.0
    %840 = vmatpush1.msra.mxu0 %v266
    %841 = vmatprep.subr.mxu0 0.0
    %842 = vmatpush2.msra.mxu0 %v297
    %843 = vmatprep.subr.mxu0 0.0
    %844 = vmatpush2.msra.mxu0 %v296
    %845 = vmatprep.subr.mxu0 0.0
    %846 = vmatpush2.msra.mxu0 %v295
    %847 = vmatprep.subr.mxu0 0.0
    %848 = vmatpush2.msra.mxu0 %v294
    %849 = vmatprep.subr.mxu0 0.0
    %850 = vmatpush2.msra.mxu0 %v293
    %851 = vmatprep.subr.mxu0 0.0
    %852 = vmatpush2.msra.mxu0 %v292
    %853 = vmatprep.subr.mxu0 0.0
    %854 = vmatpush2.msra.mxu0 %v291
    %855 = vmatprep.subr.mxu0 0.0
    %856 = vmatpush2.msra.mxu0 %v290
    %857 = vmatprep.subr.mxu0 0.0
    %858 = vmatpush2.msra.mxu0 %v289
    %859 = vmatprep.subr.mxu0 0.0
    %860 = vmatpush2.msra.mxu0 %v288
    %861 = vmatprep.subr.mxu0 0.0
    %862 = vmatpush2.msra.mxu0 %v287
    %863 = vmatprep.subr.mxu0 0.0
    %864 = vmatpush2.msra.mxu0 %v286
    %865 = vmatprep.subr.mxu0 0.0
    %866 = vmatpush2.msra.mxu0 %v285
    %867 = vmatprep.subr.mxu0 0.0
    %868 = vmatpush2.msra.mxu0 %v284
    %869 = vmatprep.subr.mxu0 0.0
    %870 = vmatpush2.msra.mxu0 %v283
    %871 = vmatprep.subr.mxu0 0.0
    %872 = vmatpush2.msra.mxu0 %v282
    %873 = vmatprep.mubr.f32.mxu0 %v123
    %874 = vmatmul.mubr.f32.gmra.mxu0 %v122
    %v875 = vpop.f32.mrf.mxu0
    %v876 = vadd.f32 %v806, %v875
    %v877 = vpop.f32.mrf.mxu0
    %878 = vdwg.mxu0
    %879 = vmatprep.subr.mxu0 0.0
    %880 = vmatpush1.msra.mxu0 %v313
    %881 = vmatprep.subr.mxu0 0.0
    %882 = vmatpush1.msra.mxu0 %v312
    %883 = vmatprep.subr.mxu0 0.0
    %884 = vmatpush1.msra.mxu0 %v311
    %885 = vmatprep.subr.mxu0 0.0
    %886 = vmatpush1.msra.mxu0 %v310
    %887 = vmatprep.subr.mxu0 0.0
    %888 = vmatpush1.msra.mxu0 %v309
    %889 = vmatprep.subr.mxu0 0.0
    %890 = vmatpush1.msra.mxu0 %v308
    %891 = vmatprep.subr.mxu0 0.0
    %892 = vmatpush1.msra.mxu0 %v307
    %893 = vmatprep.subr.mxu0 0.0
    %894 = vmatpush1.msra.mxu0 %v306
    %895 = vmatprep.subr.mxu0 0.0
    %896 = vmatpush1.msra.mxu0 %v305
    %897 = vmatprep.subr.mxu0 0.0
    %898 = vmatpush1.msra.mxu0 %v304
    %899 = vmatprep.subr.mxu0 0.0
    %900 = vmatpush1.msra.mxu0 %v303
    %901 = vmatprep.subr.mxu0 0.0
    %902 = vmatpush1.msra.mxu0 %v302
    %903 = vmatprep.subr.mxu0 0.0
    %904 = vmatpush1.msra.mxu0 %v301
    %905 = vmatprep.subr.mxu0 0.0
    %906 = vmatpush1.msra.mxu0 %v300
    %907 = vmatprep.subr.mxu0 0.0
    %908 = vmatpush1.msra.mxu0 %v299
    %909 = vmatprep.subr.mxu0 0.0
    %910 = vmatpush1.msra.mxu0 %v298
    %911 = vmatprep.subr.mxu0 0.0
    %912 = vmatpush2.msra.mxu0 %v329
    %913 = vmatprep.subr.mxu0 0.0
    %914 = vmatpush2.msra.mxu0 %v328
    %915 = vmatprep.subr.mxu0 0.0
    %916 = vmatpush2.msra.mxu0 %v327
    %917 = vmatprep.subr.mxu0 0.0
    %918 = vmatpush2.msra.mxu0 %v326
    %919 = vmatprep.subr.mxu0 0.0
    %920 = vmatpush2.msra.mxu0 %v325
    %921 = vmatprep.subr.mxu0 0.0
    %922 = vmatpush2.msra.mxu0 %v324
    %923 = vmatprep.subr.mxu0 0.0
    %924 = vmatpush2.msra.mxu0 %v323
    %925 = vmatprep.subr.mxu0 0.0
    %926 = vmatpush2.msra.mxu0 %v322
    %927 = vmatprep.subr.mxu0 0.0
    %928 = vmatpush2.msra.mxu0 %v321
    %929 = vmatprep.subr.mxu0 0.0
    %930 = vmatpush2.msra.mxu0 %v320
    %931 = vmatprep.subr.mxu0 0.0
    %932 = vmatpush2.msra.mxu0 %v319
    %933 = vmatprep.subr.mxu0 0.0
    %934 = vmatpush2.msra.mxu0 %v318
    %935 = vmatprep.subr.mxu0 0.0
    %936 = vmatpush2.msra.mxu0 %v317
    %937 = vmatprep.subr.mxu0 0.0
    %938 = vmatpush2.msra.mxu0 %v316
    %939 = vmatprep.subr.mxu0 0.0
    %940 = vmatpush2.msra.mxu0 %v315
    %941 = vmatprep.subr.mxu0 0.0
    %942 = vmatpush2.msra.mxu0 %v314
    %943 = vmatprep.mubr.f32.mxu0 %v125
    %944 = vmatmul.mubr.f32.gmra.mxu0 %v124
    %v945 = vpop.f32.mrf.mxu0
    %v946 = vadd.f32 %v876, %v945
    %v947 = vpop.f32.mrf.mxu0
    %948 = vdwg.mxu0
    %949 = vmatprep.subr.mxu0 0.0
    %950 = vmatpush1.msra.mxu0 %v345
    %951 = vmatprep.subr.mxu0 0.0
    %952 = vmatpush1.msra.mxu0 %v344
    %953 = vmatprep.subr.mxu0 0.0
    %954 = vmatpush1.msra.mxu0 %v343
    %955 = vmatprep.subr.mxu0 0.0
    %956 = vmatpush1.msra.mxu0 %v342
    %957 = vmatprep.subr.mxu0 0.0
    %958 = vmatpush1.msra.mxu0 %v341
    %959 = vmatprep.subr.mxu0 0.0
    %960 = vmatpush1.msra.mxu0 %v340
    %961 = vmatprep.subr.mxu0 0.0
    %962 = vmatpush1.msra.mxu0 %v339
    %963 = vmatprep.subr.mxu0 0.0
    %964 = vmatpush1.msra.mxu0 %v338
    %965 = vmatprep.subr.mxu0 0.0
    %966 = vmatpush1.msra.mxu0 %v337
    %967 = vmatprep.subr.mxu0 0.0
    %968 = vmatpush1.msra.mxu0 %v336
    %969 = vmatprep.subr.mxu0 0.0
    %970 = vmatpush1.msra.mxu0 %v335
    %971 = vmatprep.subr.mxu0 0.0
    %972 = vmatpush1.msra.mxu0 %v334
    %973 = vmatprep.subr.mxu0 0.0
    %974 = vmatpush1.msra.mxu0 %v333
    %975 = vmatprep.subr.mxu0 0.0
    %976 = vmatpush1.msra.mxu0 %v332
    %977 = vmatprep.subr.mxu0 0.0
    %978 = vmatpush1.msra.mxu0 %v331
    %979 = vmatprep.subr.mxu0 0.0
    %980 = vmatpush1.msra.mxu0 %v330
    %981 = vmatprep.subr.mxu0 0.0
    %982 = vmatpush2.msra.mxu0 %v361
    %983 = vmatprep.subr.mxu0 0.0
    %984 = vmatpush2.msra.mxu0 %v360
    %985 = vmatprep.subr.mxu0 0.0
    %986 = vmatpush2.msra.mxu0 %v359
    %987 = vmatprep.subr.mxu0 0.0
    %988 = vmatpush2.msra.mxu0 %v358
    %989 = vmatprep.subr.mxu0 0.0
    %990 = vmatpush2.msra.mxu0 %v357
    %991 = vmatprep.subr.mxu0 0.0
    %992 = vmatpush2.msra.mxu0 %v356
    %993 = vmatprep.subr.mxu0 0.0
    %994 = vmatpush2.msra.mxu0 %v355
    %995 = vmatprep.subr.mxu0 0.0
    %996 = vmatpush2.msra.mxu0 %v354
    %997 = vmatprep.subr.mxu0 0.0
    %998 = vmatpush2.msra.mxu0 %v353
    %999 = vmatprep.subr.mxu0 0.0
    %1000 = vmatpush2.msra.mxu0 %v352
    %1001 = vmatprep.subr.mxu0 0.0
    %1002 = vmatpush2.msra.mxu0 %v351
    %1003 = vmatprep.subr.mxu0 0.0
    %1004 = vmatpush2.msra.mxu0 %v350
    %1005 = vmatprep.subr.mxu0 0.0
    %1006 = vmatpush2.msra.mxu0 %v349
    %1007 = vmatprep.subr.mxu0 0.0
    %1008 = vmatpush2.msra.mxu0 %v348
    %1009 = vmatprep.subr.mxu0 0.0
    %1010 = vmatpush2.msra.mxu0 %v347
    %1011 = vmatprep.subr.mxu0 0.0
    %1012 = vmatpush2.msra.mxu0 %v346
    %1013 = vmatprep.mubr.f32.mxu0 %v127
    %1014 = vmatmul.mubr.f32.gmra.mxu0 %v126
    %v1015 = vpop.f32.mrf.mxu0
    %v1016 = vadd.f32 %v946, %v1015
    %v1017 = vpop.f32.mrf.mxu0
    %1018 = vdwg.mxu0
    %1019 = vmatprep.subr.mxu0 0.0
    %1020 = vmatpush1.msra.mxu0 %v377
    %1021 = vmatprep.subr.mxu0 0.0
    %1022 = vmatpush1.msra.mxu0 %v376
    %1023 = vmatprep.subr.mxu0 0.0
    %1024 = vmatpush1.msra.mxu0 %v375
    %1025 = vmatprep.subr.mxu0 0.0
    %1026 = vmatpush1.msra.mxu0 %v374
    %1027 = vmatprep.subr.mxu0 0.0
    %1028 = vmatpush1.msra.mxu0 %v373
    %1029 = vmatprep.subr.mxu0 0.0
    %1030 = vmatpush1.msra.mxu0 %v372
    %1031 = vmatprep.subr.mxu0 0.0
    %1032 = vmatpush1.msra.mxu0 %v371
    %1033 = vmatprep.subr.mxu0 0.0
    %1034 = vmatpush1.msra.mxu0 %v370
    %1035 = vmatprep.subr.mxu0 0.0
    %1036 = vmatpush1.msra.mxu0 %v369
    %1037 = vmatprep.subr.mxu0 0.0
    %1038 = vmatpush1.msra.mxu0 %v368
    %1039 = vmatprep.subr.mxu0 0.0
    %1040 = vmatpush1.msra.mxu0 %v367
    %1041 = vmatprep.subr.mxu0 0.0
    %1042 = vmatpush1.msra.mxu0 %v366
    %1043 = vmatprep.subr.mxu0 0.0
    %1044 = vmatpush1.msra.mxu0 %v365
    %1045 = vmatprep.subr.mxu0 0.0
    %1046 = vmatpush1.msra.mxu0 %v364
    %1047 = vmatprep.subr.mxu0 0.0
    %1048 = vmatpush1.msra.mxu0 %v363
    %1049 = vmatprep.subr.mxu0 0.0
    %1050 = vmatpush1.msra.mxu0 %v362
    %1051 = vmatprep.subr.mxu0 0.0
    %1052 = vmatpush2.msra.mxu0 %v393
    %1053 = vmatprep.subr.mxu0 0.0
    %1054 = vmatpush2.msra.mxu0 %v392
    %1055 = vmatprep.subr.mxu0 0.0
    %1056 = vmatpush2.msra.mxu0 %v391
    %1057 = vmatprep.subr.mxu0 0.0
    %1058 = vmatpush2.msra.mxu0 %v390
    %1059 = vmatprep.subr.mxu0 0.0
    %1060 = vmatpush2.msra.mxu0 %v389
    %1061 = vmatprep.subr.mxu0 0.0
    %1062 = vmatpush2.msra.mxu0 %v388
    %1063 = vmatprep.subr.mxu0 0.0
    %1064 = vmatpush2.msra.mxu0 %v387
    %1065 = vmatprep.subr.mxu0 0.0
    %1066 = vmatpush2.msra.mxu0 %v386
    %1067 = vmatprep.subr.mxu0 0.0
    %1068 = vmatpush2.msra.mxu0 %v385
    %1069 = vmatprep.subr.mxu0 0.0
    %1070 = vmatpush2.msra.mxu0 %v384
    %1071 = vmatprep.subr.mxu0 0.0
    %1072 = vmatpush2.msra.mxu0 %v383
    %1073 = vmatprep.subr.mxu0 0.0
    %1074 = vmatpush2.msra.mxu0 %v382
    %1075 = vmatprep.subr.mxu0 0.0
    %1076 = vmatpush2.msra.mxu0 %v381
    %1077 = vmatprep.subr.mxu0 0.0
    %1078 = vmatpush2.msra.mxu0 %v380
    %1079 = vmatprep.subr.mxu0 0.0
    %1080 = vmatpush2.msra.mxu0 %v379
    %1081 = vmatprep.subr.mxu0 0.0
    %1082 = vmatpush2.msra.mxu0 %v378
    %1083 = vmatprep.mubr.f32.mxu0 %v129
    %1084 = vmatmul.mubr.f32.gmra.mxu0 %v128
    %v1085 = vpop.f32.mrf.mxu0
    %v1086 = vadd.f32 %v1016, %v1085
    %v1087 = vpop.f32.mrf.mxu0
    %1088 = vdwg.mxu0
    %1089 = vmatprep.subr.mxu0 0.0
    %1090 = vmatpush1.msra.mxu0 %v409
    %1091 = vmatprep.subr.mxu0 0.0
    %1092 = vmatpush1.msra.mxu0 %v408
    %1093 = vmatprep.subr.mxu0 0.0
    %1094 = vmatpush1.msra.mxu0 %v407
    %1095 = vmatprep.subr.mxu0 0.0
    %1096 = vmatpush1.msra.mxu0 %v406
    %1097 = vmatprep.subr.mxu0 0.0
    %1098 = vmatpush1.msra.mxu0 %v405
    %1099 = vmatprep.subr.mxu0 0.0
    %1100 = vmatpush1.msra.mxu0 %v404
    %1101 = vmatprep.subr.mxu0 0.0
    %1102 = vmatpush1.msra.mxu0 %v403
    %1103 = vmatprep.subr.mxu0 0.0
    %1104 = vmatpush1.msra.mxu0 %v402
    %1105 = vmatprep.subr.mxu0 0.0
    %1106 = vmatpush1.msra.mxu0 %v401
    %1107 = vmatprep.subr.mxu0 0.0
    %1108 = vmatpush1.msra.mxu0 %v400
    %1109 = vmatprep.subr.mxu0 0.0
    %1110 = vmatpush1.msra.mxu0 %v399
    %1111 = vmatprep.subr.mxu0 0.0
    %1112 = vmatpush1.msra.mxu0 %v398
    %1113 = vmatprep.subr.mxu0 0.0
    %1114 = vmatpush1.msra.mxu0 %v397
    %1115 = vmatprep.subr.mxu0 0.0
    %1116 = vmatpush1.msra.mxu0 %v396
    %1117 = vmatprep.subr.mxu0 0.0
    %1118 = vmatpush1.msra.mxu0 %v395
    %1119 = vmatprep.subr.mxu0 0.0
    %1120 = vmatpush1.msra.mxu0 %v394
    %1121 = vmatprep.subr.mxu0 0.0
    %1122 = vmatpush2.msra.mxu0 %v425
    %1123 = vmatprep.subr.mxu0 0.0
    %1124 = vmatpush2.msra.mxu0 %v424
    %1125 = vmatprep.subr.mxu0 0.0
    %1126 = vmatpush2.msra.mxu0 %v423
    %1127 = vmatprep.subr.mxu0 0.0
    %1128 = vmatpush2.msra.mxu0 %v422
    %1129 = vmatprep.subr.mxu0 0.0
    %1130 = vmatpush2.msra.mxu0 %v421
    %1131 = vmatprep.subr.mxu0 0.0
    %1132 = vmatpush2.msra.mxu0 %v420
    %1133 = vmatprep.subr.mxu0 0.0
    %1134 = vmatpush2.msra.mxu0 %v419
    %1135 = vmatprep.subr.mxu0 0.0
    %1136 = vmatpush2.msra.mxu0 %v418
    %1137 = vmatprep.subr.mxu0 0.0
    %1138 = vmatpush2.msra.mxu0 %v417
    %1139 = vmatprep.subr.mxu0 0.0
    %1140 = vmatpush2.msra.mxu0 %v416
    %1141 = vmatprep.subr.mxu0 0.0
    %1142 = vmatpush2.msra.mxu0 %v415
    %1143 = vmatprep.subr.mxu0 0.0
    %1144 = vmatpush2.msra.mxu0 %v414
    %1145 = vmatprep.subr.mxu0 0.0
    %1146 = vmatpush2.msra.mxu0 %v413
    %1147 = vmatprep.subr.mxu0 0.0
    %1148 = vmatpush2.msra.mxu0 %v412
    %1149 = vmatprep.subr.mxu0 0.0
    %1150 = vmatpush2.msra.mxu0 %v411
    %1151 = vmatprep.subr.mxu0 0.0
    %1152 = vmatpush2.msra.mxu0 %v410
    %1153 = vmatprep.mubr.f32.mxu0 %v131
    %1154 = vmatmul.mubr.f32.gmra.mxu0 %v130
    %v1155 = vpop.f32.mrf.mxu0
    %v1156 = vadd.f32 %v1086, %v1155
    %v1157 = vpop.f32.mrf.mxu0
    %1158 = vdwg.mxu0
    %1159 = vmatprep.subr.mxu0 0.0
    %1160 = vmatpush1.msra.mxu0 %v441
    %1161 = vmatprep.subr.mxu0 0.0
    %1162 = vmatpush1.msra.mxu0 %v440
    %1163 = vmatprep.subr.mxu0 0.0
    %1164 = vmatpush1.msra.mxu0 %v439
    %1165 = vmatprep.subr.mxu0 0.0
    %1166 = vmatpush1.msra.mxu0 %v438
    %1167 = vmatprep.subr.mxu0 0.0
    %1168 = vmatpush1.msra.mxu0 %v437
    %1169 = vmatprep.subr.mxu0 0.0
    %1170 = vmatpush1.msra.mxu0 %v436
    %1171 = vmatprep.subr.mxu0 0.0
    %1172 = vmatpush1.msra.mxu0 %v435
    %1173 = vmatprep.subr.mxu0 0.0
    %1174 = vmatpush1.msra.mxu0 %v434
    %1175 = vmatprep.subr.mxu0 0.0
    %1176 = vmatpush1.msra.mxu0 %v433
    %1177 = vmatprep.subr.mxu0 0.0
    %1178 = vmatpush1.msra.mxu0 %v432
    %1179 = vmatprep.subr.mxu0 0.0
    %1180 = vmatpush1.msra.mxu0 %v431
    %1181 = vmatprep.subr.mxu0 0.0
    %1182 = vmatpush1.msra.mxu0 %v430
    %1183 = vmatprep.subr.mxu0 0.0
    %1184 = vmatpush1.msra.mxu0 %v429
    %1185 = vmatprep.subr.mxu0 0.0
    %1186 = vmatpush1.msra.mxu0 %v428
    %1187 = vmatprep.subr.mxu0 0.0
    %1188 = vmatpush1.msra.mxu0 %v427
    %1189 = vmatprep.subr.mxu0 0.0
    %1190 = vmatpush1.msra.mxu0 %v426
    %1191 = vmatprep.subr.mxu0 0.0
    %1192 = vmatpush2.msra.mxu0 %v457
    %1193 = vmatprep.subr.mxu0 0.0
    %1194 = vmatpush2.msra.mxu0 %v456
    %1195 = vmatprep.subr.mxu0 0.0
    %1196 = vmatpush2.msra.mxu0 %v455
    %1197 = vmatprep.subr.mxu0 0.0
    %1198 = vmatpush2.msra.mxu0 %v454
    %1199 = vmatprep.subr.mxu0 0.0
    %1200 = vmatpush2.msra.mxu0 %v453
    %1201 = vmatprep.subr.mxu0 0.0
    %1202 = vmatpush2.msra.mxu0 %v452
    %1203 = vmatprep.subr.mxu0 0.0
    %1204 = vmatpush2.msra.mxu0 %v451
    %1205 = vmatprep.subr.mxu0 0.0
    %1206 = vmatpush2.msra.mxu0 %v450
    %1207 = vmatprep.subr.mxu0 0.0
    %1208 = vmatpush2.msra.mxu0 %v449
    %1209 = vmatprep.subr.mxu0 0.0
    %1210 = vmatpush2.msra.mxu0 %v448
    %1211 = vmatprep.subr.mxu0 0.0
    %1212 = vmatpush2.msra.mxu0 %v447
    %1213 = vmatprep.subr.mxu0 0.0
    %1214 = vmatpush2.msra.mxu0 %v446
    %1215 = vmatprep.subr.mxu0 0.0
    %1216 = vmatpush2.msra.mxu0 %v445
    %1217 = vmatprep.subr.mxu0 0.0
    %1218 = vmatpush2.msra.mxu0 %v444
    %1219 = vmatprep.subr.mxu0 0.0
    %1220 = vmatpush2.msra.mxu0 %v443
    %1221 = vmatprep.subr.mxu0 0.0
    %1222 = vmatpush2.msra.mxu0 %v442
    %1223 = vmatprep.mubr.f32.mxu0 %v133
    %1224 = vmatmul.mubr.f32.gmra.mxu0 %v132
    %v1225 = vpop.f32.mrf.mxu0
    %v1226 = vadd.f32 %v1156, %v1225
    %v1227 = vpop.f32.mrf.mxu0
    %1228 = vdwg.mxu0
    %1229 = vmatprep.subr.mxu0 0.0
    %1230 = vmatpush1.msra.mxu0 %v473
    %1231 = vmatprep.subr.mxu0 0.0
    %1232 = vmatpush1.msra.mxu0 %v472
    %1233 = vmatprep.subr.mxu0 0.0
    %1234 = vmatpush1.msra.mxu0 %v471
    %1235 = vmatprep.subr.mxu0 0.0
    %1236 = vmatpush1.msra.mxu0 %v470
    %1237 = vmatprep.subr.mxu0 0.0
    %1238 = vmatpush1.msra.mxu0 %v469
    %1239 = vmatprep.subr.mxu0 0.0
    %1240 = vmatpush1.msra.mxu0 %v468
    %1241 = vmatprep.subr.mxu0 0.0
    %1242 = vmatpush1.msra.mxu0 %v467
    %1243 = vmatprep.subr.mxu0 0.0
    %1244 = vmatpush1.msra.mxu0 %v466
    %1245 = vmatprep.subr.mxu0 0.0
    %1246 = vmatpush1.msra.mxu0 %v465
    %1247 = vmatprep.subr.mxu0 0.0
    %1248 = vmatpush1.msra.mxu0 %v464
    %1249 = vmatprep.subr.mxu0 0.0
    %1250 = vmatpush1.msra.mxu0 %v463
    %1251 = vmatprep.subr.mxu0 0.0
    %1252 = vmatpush1.msra.mxu0 %v462
    %1253 = vmatprep.subr.mxu0 0.0
    %1254 = vmatpush1.msra.mxu0 %v461
    %1255 = vmatprep.subr.mxu0 0.0
    %1256 = vmatpush1.msra.mxu0 %v460
    %1257 = vmatprep.subr.mxu0 0.0
    %1258 = vmatpush1.msra.mxu0 %v459
    %1259 = vmatprep.subr.mxu0 0.0
    %1260 = vmatpush1.msra.mxu0 %v458
    %1261 = vmatprep.subr.mxu0 0.0
    %1262 = vmatpush2.msra.mxu0 %v489
    %1263 = vmatprep.subr.mxu0 0.0
    %1264 = vmatpush2.msra.mxu0 %v488
    %1265 = vmatprep.subr.mxu0 0.0
    %1266 = vmatpush2.msra.mxu0 %v487
    %1267 = vmatprep.subr.mxu0 0.0
    %1268 = vmatpush2.msra.mxu0 %v486
    %1269 = vmatprep.subr.mxu0 0.0
    %1270 = vmatpush2.msra.mxu0 %v485
    %1271 = vmatprep.subr.mxu0 0.0
    %1272 = vmatpush2.msra.mxu0 %v484
    %1273 = vmatprep.subr.mxu0 0.0
    %1274 = vmatpush2.msra.mxu0 %v483
    %1275 = vmatprep.subr.mxu0 0.0
    %1276 = vmatpush2.msra.mxu0 %v482
    %1277 = vmatprep.subr.mxu0 0.0
    %1278 = vmatpush2.msra.mxu0 %v481
    %1279 = vmatprep.subr.mxu0 0.0
    %1280 = vmatpush2.msra.mxu0 %v480
    %1281 = vmatprep.subr.mxu0 0.0
    %1282 = vmatpush2.msra.mxu0 %v479
    %1283 = vmatprep.subr.mxu0 0.0
    %1284 = vmatpush2.msra.mxu0 %v478
    %1285 = vmatprep.subr.mxu0 0.0
    %1286 = vmatpush2.msra.mxu0 %v477
    %1287 = vmatprep.subr.mxu0 0.0
    %1288 = vmatpush2.msra.mxu0 %v476
    %1289 = vmatprep.subr.mxu0 0.0
    %1290 = vmatpush2.msra.mxu0 %v475
    %1291 = vmatprep.subr.mxu0 0.0
    %1292 = vmatpush2.msra.mxu0 %v474
    %1293 = vmatprep.mubr.f32.mxu0 %v135
    %1294 = vmatmul.mubr.f32.gmra.mxu0 %v134
    %v1295 = vpop.f32.mrf.mxu0
    %v1296 = vadd.f32 %v1226, %v1295
    %v1297 = vpop.f32.mrf.mxu0
    %1298 = vdwg.mxu0
    %1299 = vmatprep.subr.mxu0 0.0
    %1300 = vmatpush1.msra.mxu0 %v505
    %1301 = vmatprep.subr.mxu0 0.0
    %1302 = vmatpush1.msra.mxu0 %v504
    %1303 = vmatprep.subr.mxu0 0.0
    %1304 = vmatpush1.msra.mxu0 %v503
    %1305 = vmatprep.subr.mxu0 0.0
    %1306 = vmatpush1.msra.mxu0 %v502
    %1307 = vmatprep.subr.mxu0 0.0
    %1308 = vmatpush1.msra.mxu0 %v501
    %1309 = vmatprep.subr.mxu0 0.0
    %1310 = vmatpush1.msra.mxu0 %v500
    %1311 = vmatprep.subr.mxu0 0.0
    %1312 = vmatpush1.msra.mxu0 %v499
    %1313 = vmatprep.subr.mxu0 0.0
    %1314 = vmatpush1.msra.mxu0 %v498
    %1315 = vmatprep.subr.mxu0 0.0
    %1316 = vmatpush1.msra.mxu0 %v497
    %1317 = vmatprep.subr.mxu0 0.0
    %1318 = vmatpush1.msra.mxu0 %v496
    %1319 = vmatprep.subr.mxu0 0.0
    %1320 = vmatpush1.msra.mxu0 %v495
    %1321 = vmatprep.subr.mxu0 0.0
    %1322 = vmatpush1.msra.mxu0 %v494
    %1323 = vmatprep.subr.mxu0 0.0
    %1324 = vmatpush1.msra.mxu0 %v493
    %1325 = vmatprep.subr.mxu0 0.0
    %1326 = vmatpush1.msra.mxu0 %v492
    %1327 = vmatprep.subr.mxu0 0.0
    %1328 = vmatpush1.msra.mxu0 %v491
    %1329 = vmatprep.subr.mxu0 0.0
    %1330 = vmatpush1.msra.mxu0 %v490
    %1331 = vmatprep.subr.mxu0 0.0
    %1332 = vmatpush2.msra.mxu0 %v521
    %1333 = vmatprep.subr.mxu0 0.0
    %1334 = vmatpush2.msra.mxu0 %v520
    %1335 = vmatprep.subr.mxu0 0.0
    %1336 = vmatpush2.msra.mxu0 %v519
    %1337 = vmatprep.subr.mxu0 0.0
    %1338 = vmatpush2.msra.mxu0 %v518
    %1339 = vmatprep.subr.mxu0 0.0
    %1340 = vmatpush2.msra.mxu0 %v517
    %1341 = vmatprep.subr.mxu0 0.0
    %1342 = vmatpush2.msra.mxu0 %v516
    %1343 = vmatprep.subr.mxu0 0.0
    %1344 = vmatpush2.msra.mxu0 %v515
    %1345 = vmatprep.subr.mxu0 0.0
    %1346 = vmatpush2.msra.mxu0 %v514
    %1347 = vmatprep.subr.mxu0 0.0
    %1348 = vmatpush2.msra.mxu0 %v513
    %1349 = vmatprep.subr.mxu0 0.0
    %1350 = vmatpush2.msra.mxu0 %v512
    %1351 = vmatprep.subr.mxu0 0.0
    %1352 = vmatpush2.msra.mxu0 %v511
    %1353 = vmatprep.subr.mxu0 0.0
    %1354 = vmatpush2.msra.mxu0 %v510
    %1355 = vmatprep.subr.mxu0 0.0
    %1356 = vmatpush2.msra.mxu0 %v509
    %1357 = vmatprep.subr.mxu0 0.0
    %1358 = vmatpush2.msra.mxu0 %v508
    %1359 = vmatprep.subr.mxu0 0.0
    %1360 = vmatpush2.msra.mxu0 %v507
    %1361 = vmatprep.subr.mxu0 0.0
    %1362 = vmatpush2.msra.mxu0 %v506
    %1363 = vmatprep.mubr.f32.mxu0 %v137
    %1364 = vmatmul.mubr.f32.gmra.mxu0 %v136
    %v1365 = vpop.f32.mrf.mxu0
    %v1366 = vadd.f32 %v1296, %v1365
    %v1367 = vpop.f32.mrf.mxu0
    %1368 = vdwg.mxu0
    %v1369 = vmax.f32 %v1366, 0.0
    %v1370 = vld [vmem:[#allocation8] sm:$0xff]
    %v1371 = vld [vmem:[#allocation8 + $0x8] sm:$0xff]
    %v1372 = vld [vmem:[#allocation8 + $0x10] sm:$0xff]
    %v1373 = vld [vmem:[#allocation8 + $0x18] sm:$0xff]
    %v1374 = vld [vmem:[#allocation8 + $0x20] sm:$0xff]
    %v1375 = vld [vmem:[#allocation8 + $0x28] sm:$0xff]
    %v1376 = vld [vmem:[#allocation8 + $0x30] sm:$0xff]
    %v1377 = vld [vmem:[#allocation8 + $0x38] sm:$0xff]
    %v1378 = vld [vmem:[#allocation8 + $0x40] sm:$0xff]
    %v1379 = vld [vmem:[#allocation8 + $0x48] sm:$0xff]
    %v1380 = vld [vmem:[#allocation8 + $0x50] sm:$0xff]
    %v1381 = vld [vmem:[#allocation8 + $0x58] sm:$0xff]
    %v1382 = vld [vmem:[#allocation8 + $0x60] sm:$0xff]
    %v1383 = vld [vmem:[#allocation8 + $0x68] sm:$0xff]
    %v1384 = vld [vmem:[#allocation8 + $0x70] sm:$0xff]
    %v1385 = vld [vmem:[#allocation8 + $0x78] sm:$0xff]
    %v1386 = vld [vmem:[#allocation10] sm:$0x1]
    %v1388 = vlaneseq
    %v1389 = vshrl.u32 %v1388, 7
    %v1390 = vsub.s32 0, %v1389
    %v1391 = vrot.slane %v1386, %v1390
    %1393 = vmatprep.subr.mxu0 0.0
    %1394 = vmatpush1.msra.mxu0 %v1385
    %1395 = vmatprep.subr.mxu0 0.0
    %1396 = vmatpush1.msra.mxu0 %v1384
    %1397 = vmatprep.subr.mxu0 0.0
    %1398 = vmatpush1.msra.mxu0 %v1383
    %1399 = vmatprep.subr.mxu0 0.0
    %1400 = vmatpush1.msra.mxu0 %v1382
    %1401 = vmatprep.subr.mxu0 0.0
    %1402 = vmatpush1.msra.mxu0 %v1381
    %1403 = vmatprep.subr.mxu0 0.0
    %1404 = vmatpush1.msra.mxu0 %v1380
    %1405 = vmatprep.subr.mxu0 0.0
    %1406 = vmatpush1.msra.mxu0 %v1379
    %1407 = vmatprep.subr.mxu0 0.0
    %1408 = vmatpush1.msra.mxu0 %v1378
    %1409 = vmatprep.subr.mxu0 0.0
    %1410 = vmatpush1.msra.mxu0 %v1377
    %1411 = vmatprep.subr.mxu0 0.0
    %1412 = vmatpush1.msra.mxu0 %v1376
    %1413 = vmatprep.subr.mxu0 0.0
    %1414 = vmatpush1.msra.mxu0 %v1375
    %1415 = vmatprep.subr.mxu0 0.0
    %1416 = vmatpush1.msra.mxu0 %v1374
    %1417 = vmatprep.subr.mxu0 0.0
    %1418 = vmatpush1.msra.mxu0 %v1373
    %1419 = vmatprep.subr.mxu0 0.0
    %1420 = vmatpush1.msra.mxu0 %v1372
    %1421 = vmatprep.subr.mxu0 0.0
    %1422 = vmatpush1.msra.mxu0 %v1371
    %1423 = vmatprep.subr.mxu0 0.0
    %1424 = vmatpush1.msra.mxu0 %v1370
    %1425 = vmatprep.subr.mxu0 0.0
    %1426 = vmatpush2.msra.mxu0 0.0
    %1427 = vmatprep.subr.mxu0 0.0
    %1428 = vmatpush2.msra.mxu0 0.0
    %1429 = vmatprep.subr.mxu0 0.0
    %1430 = vmatpush2.msra.mxu0 0.0
    %1431 = vmatprep.subr.mxu0 0.0
    %1432 = vmatpush2.msra.mxu0 0.0
    %1433 = vmatprep.subr.mxu0 0.0
    %1434 = vmatpush2.msra.mxu0 0.0
    %1435 = vmatprep.subr.mxu0 0.0
    %1436 = vmatpush2.msra.mxu0 0.0
    %1437 = vmatprep.subr.mxu0 0.0
    %1438 = vmatpush2.msra.mxu0 0.0
    %1439 = vmatprep.subr.mxu0 0.0
    %1440 = vmatpush2.msra.mxu0 0.0
    %1441 = vmatprep.subr.mxu0 0.0
    %1442 = vmatpush2.msra.mxu0 0.0
    %1443 = vmatprep.subr.mxu0 0.0
    %1444 = vmatpush2.msra.mxu0 0.0
    %1445 = vmatprep.subr.mxu0 0.0
    %1446 = vmatpush2.msra.mxu0 0.0
    %1447 = vmatprep.subr.mxu0 0.0
    %1448 = vmatpush2.msra.mxu0 0.0
    %1449 = vmatprep.subr.mxu0 0.0
    %1450 = vmatpush2.msra.mxu0 0.0
    %1451 = vmatprep.subr.mxu0 0.0
    %1452 = vmatpush2.msra.mxu0 0.0
    %1453 = vmatprep.subr.mxu0 0.0
    %1454 = vmatpush2.msra.mxu0 0.0
    %1455 = vmatprep.subr.mxu0 0.0
    %1456 = vmatpush2.msra.mxu0 0.0
    %1457 = vmatprep.mubr.f32.mxu0 0.0
    %1458 = vmatmul.mubr.f32.gmra.mxu0 %v1369
    %v1459 = vpop.f32.mrf.mxu0
    %v1460 = vadd.f32 %v1391, %v1459
    %v1461 = vpop.f32.mrf.mxu0
    %1462 = vdwg.mxu0
    %v1463 = vmax.f32 %v1460, 0.0
    %v1464 = vld [vmem:[#allocation11] sm:$0xff]
    %v1465 = vld [vmem:[#allocation11 + $0x8] sm:$0xff]
    %v1466 = vld [vmem:[#allocation11 + $0x10] sm:$0xff]
    %v1467 = vld [vmem:[#allocation11 + $0x18] sm:$0xff]
    %v1468 = vld [vmem:[#allocation11 + $0x20] sm:$0xff]
    %v1469 = vld [vmem:[#allocation11 + $0x28] sm:$0xff]
    %v1470 = vld [vmem:[#allocation11 + $0x30] sm:$0xff]
    %v1471 = vld [vmem:[#allocation11 + $0x38] sm:$0xff]
    %v1472 = vld [vmem:[#allocation11 + $0x40] sm:$0xff]
    %v1473 = vld [vmem:[#allocation11 + $0x48] sm:$0xff]
    %v1474 = vld [vmem:[#allocation11 + $0x50] sm:$0xff]
    %v1475 = vld [vmem:[#allocation11 + $0x58] sm:$0xff]
    %v1476 = vld [vmem:[#allocation11 + $0x60] sm:$0xff]
    %v1477 = vld [vmem:[#allocation11 + $0x68] sm:$0xff]
    %v1478 = vld [vmem:[#allocation11 + $0x70] sm:$0xff]
    %v1479 = vld [vmem:[#allocation11 + $0x78] sm:$0xff]
    %v1480 = vld [vmem:[#allocation13] sm:$0x1]
    %v1482 = vlaneseq
    %v1483 = vshrl.u32 %v1482, 7
    %v1484 = vsub.s32 0, %v1483
    %v1485 = vrot.slane %v1480, %v1484
    %1487 = vmatprep.subr.mxu0 0.0
    %1488 = vmatpush1.msra.mxu0 %v1479
    %1489 = vmatprep.subr.mxu0 0.0
    %1490 = vmatpush1.msra.mxu0 %v1478
    %1491 = vmatprep.subr.mxu0 0.0
    %1492 = vmatpush1.msra.mxu0 %v1477
    %1493 = vmatprep.subr.mxu0 0.0
    %1494 = vmatpush1.msra.mxu0 %v1476
    %1495 = vmatprep.subr.mxu0 0.0
    %1496 = vmatpush1.msra.mxu0 %v1475
    %1497 = vmatprep.subr.mxu0 0.0
    %1498 = vmatpush1.msra.mxu0 %v1474
    %1499 = vmatprep.subr.mxu0 0.0
    %1500 = vmatpush1.msra.mxu0 %v1473
    %1501 = vmatprep.subr.mxu0 0.0
    %1502 = vmatpush1.msra.mxu0 %v1472
    %1503 = vmatprep.subr.mxu0 0.0
    %1504 = vmatpush1.msra.mxu0 %v1471
    %1505 = vmatprep.subr.mxu0 0.0
    %1506 = vmatpush1.msra.mxu0 %v1470
    %1507 = vmatprep.subr.mxu0 0.0
    %1508 = vmatpush1.msra.mxu0 %v1469
    %1509 = vmatprep.subr.mxu0 0.0
    %1510 = vmatpush1.msra.mxu0 %v1468
    %1511 = vmatprep.subr.mxu0 0.0
    %1512 = vmatpush1.msra.mxu0 %v1467
    %1513 = vmatprep.subr.mxu0 0.0
    %1514 = vmatpush1.msra.mxu0 %v1466
    %1515 = vmatprep.subr.mxu0 0.0
    %1516 = vmatpush1.msra.mxu0 %v1465
    %1517 = vmatprep.subr.mxu0 0.0
    %1518 = vmatpush1.msra.mxu0 %v1464
    %1519 = vmatprep.subr.mxu0 0.0
    %1520 = vmatpush2.msra.mxu0 0.0
    %1521 = vmatprep.subr.mxu0 0.0
    %1522 = vmatpush2.msra.mxu0 0.0
    %1523 = vmatprep.subr.mxu0 0.0
    %1524 = vmatpush2.msra.mxu0 0.0
    %1525 = vmatprep.subr.mxu0 0.0
    %1526 = vmatpush2.msra.mxu0 0.0
    %1527 = vmatprep.subr.mxu0 0.0
    %1528 = vmatpush2.msra.mxu0 0.0
    %1529 = vmatprep.subr.mxu0 0.0
    %1530 = vmatpush2.msra.mxu0 0.0
    %1531 = vmatprep.subr.mxu0 0.0
    %1532 = vmatpush2.msra.mxu0 0.0
    %1533 = vmatprep.subr.mxu0 0.0
    %1534 = vmatpush2.msra.mxu0 0.0
    %1535 = vmatprep.subr.mxu0 0.0
    %1536 = vmatpush2.msra.mxu0 0.0
    %1537 = vmatprep.subr.mxu0 0.0
    %1538 = vmatpush2.msra.mxu0 0.0
    %1539 = vmatprep.subr.mxu0 0.0
    %1540 = vmatpush2.msra.mxu0 0.0
    %1541 = vmatprep.subr.mxu0 0.0
    %1542 = vmatpush2.msra.mxu0 0.0
    %1543 = vmatprep.subr.mxu0 0.0
    %1544 = vmatpush2.msra.mxu0 0.0
    %1545 = vmatprep.subr.mxu0 0.0
    %1546 = vmatpush2.msra.mxu0 0.0
    %1547 = vmatprep.subr.mxu0 0.0
    %1548 = vmatpush2.msra.mxu0 0.0
    %1549 = vmatprep.subr.mxu0 0.0
    %1550 = vmatpush2.msra.mxu0 0.0
    %1551 = vmatprep.mubr.f32.mxu0 0.0
    %1552 = vmatmul.mubr.f32.gmra.mxu0 %v1463
    %v1553 = vpop.f32.mrf.mxu0
    %v1554 = vadd.f32 %v1485, %v1553
    %v1555 = vpop.f32.mrf.mxu0
    %1556 = vdwg.mxu0
    %1557 = vst [vmem:[#allocation14] sm:$0xff] %v1554
    // Predicated region
    $region58: #{tpu_custom_call.1} parent=1 // pred_check
      _
    $region59: #{tpu_custom_call.1} parent=1 // pred_check_branch
      %1559 = sbr.rel (0) target = $region61
    $region60: #{tpu_custom_call.1} parent=1 // pred_region
      %s1561 = ssub.s32 128, 128
      %1562 = vsyncadd [#allocation4], %s1561
      %s1564 = sshll.u32 [#allocation14], 4
      %s1565 = int_to_ptr.vmem [resolvable:$true] %s1564
      %1567 = dma.vmem_to_hbm [thread:$0]  %s1565, 128, %s7, [#allocation4]
    $region61: #{tpu_custom_call.1} parent=1 // pred_fallthru
      _
    // Predicated region
    $region62: #{tpu_custom_call.1} parent=1 // pred_check
      _
    $region63: #{tpu_custom_call.1} parent=1 // pred_check_branch
      %1569 = sbr.rel (0) target = $region65
    $region64: #{tpu_custom_call.1} parent=1 // pred_region
      %1570 = dma.done [#allocation4], 128
    $region65: #{tpu_custom_call.1} parent=1 // pred_fallthru
      _
    %1571 = vsyncpa [#allocation3], 1
    %1572 = vsyncpa [#allocation6], 1
    %1573 = vsyncpa [#allocation9], 1
    %1574 = vsyncpa [#allocation12], 1
    %1575 = vsyncpa [#allocation4], 1

</llo_original>
